<compile_context>
chip_gen: v7x
topology: tpu7x:2x2x1
jax: 0.10.0
libtpu: 0.0.40
codegen_flags: <defaults>
</compile_context>

<pallas_src>
import jax
import jax.numpy as jnp
from jax import lax
from jax.experimental import pallas as pl
from jax.experimental.pallas import tpu as pltpu

LEAKY_SLOPE = 0.01   # nn.LeakyReLU default negative_slope
BN_EPS = 1e-5        # nn.BatchNorm2d default eps
KH = KW = 4


def _round_up(v, m):
    return (v + m - 1) // m * m


# ----------------------------------------------------------------------------
# Pallas kernel: y[Cout, tm] = W[Cout, K] @ P[K, tm]  (bf16 MXU, fp32 acc)
#                (+ bias) (+ BatchNorm, batch stats) (+ LeakyReLU)
#                (+ optionally fused final 4x4 valid conv -> logits [1, N])
# ----------------------------------------------------------------------------
def _make_layer_kernel(use_bias, use_bn, apply_act, fuse_head):
    def kernel(*refs):
        it = iter(refs)
        w_ref = next(it)                            # [Cout, Kp] bf16
        p_ref = next(it)                            # [Kp, tm]   bf16
        b_ref = next(it) if use_bias else None      # [Cout, 1]  f32
        g_ref = next(it) if use_bn else None        # [Cout, 1]  f32
        beta_ref = next(it) if use_bn else None     # [Cout, 1]  f32
        w5_ref = next(it) if fuse_head else None    # [Cout, M]  f32 (tiled head w)
        gsum_ref = next(it) if fuse_head else None  # [M, N]     f32 (group-sum)
        o_ref = next(it)

        # Native-rate MXU matmul: bf16 operands, fp32 accumulation.
        y = jnp.dot(w_ref[...], p_ref[...], preferred_element_type=jnp.float32)

        if use_bias:
            y = y + b_ref[...]

        if use_bn:
            # BatchNorm2d training-mode batch stats over M = N*Ho*Wo (lane
            # reduction). Two-pass variance avoids E[x^2]-mean^2 cancellation.
            mean = jnp.mean(y, axis=1, keepdims=True)
            yc = y - mean
            var = jnp.mean(yc * yc, axis=1, keepdims=True)
            y = yc * lax.rsqrt(var + BN_EPS) * g_ref[...] + beta_ref[...]

        if apply_act:
            y = jnp.where(y >= 0, y, LEAKY_SLOPE * y)

        if fuse_head:
            # Fused final layer (Conv2d -> 1 channel, 4x4 valid) + Flatten:
            #   logit[n] = sum_{c,s} w5[c, s] * y[c, n*16 + s]
            col = jnp.sum(y * w5_ref[...], axis=0, keepdims=True)      # [1, M]
            o_ref[...] = jnp.dot(col, gsum_ref[...],
                                 preferred_element_type=jnp.float32)   # [1, N]
        else:
            o_ref[...] = y.astype(o_ref.dtype)

    return kernel


# ----------------------------------------------------------------------------
# im2col on channel-major activations (no transpose; C slow, (kh,kw) fast
# to match the OIHW weight flatten)
# ----------------------------------------------------------------------------
def _im2col_cnhw(x, kh, kw, stride, pad):
    """x: [C, N, H, W] -> patches [C*kh*kw, N*Ho*Wo]."""
    c, n, h, w = x.shape
    xp = jnp.pad(x, ((0, 0), (0, 0), (pad, pad), (pad, pad)))
    ho = (h + 2 * pad - kh) // stride + 1
    wo = (w + 2 * pad - kw) // stride + 1
    cols = []
    for i in range(kh):
        for j in range(kw):
            cols.append(xp[:, :, i:i + stride * ho:stride, j:j + stride * wo:stride])
    p = jnp.stack(cols, axis=1)                       # [C, kh*kw, N, Ho, Wo]
    return p.reshape(c * kh * kw, n * ho * wo), ho, wo


# ----------------------------------------------------------------------------
# One discriminator layer (conv [+bias] [+BN] [+LeakyReLU] [+fused head])
# ----------------------------------------------------------------------------
def conv_block(x_cnhw, w_gemm, *, stride, pad, bias=None, bn_params=None,
               act=True, head=None):
    """x_cnhw: [Cin, N, H, W]; w_gemm: [Cout, Kp] bf16 (GEMM-ready)."""
    _, n, _, _ = x_cnhw.shape
    cout, kp = w_gemm.shape

    patches, ho, wo = _im2col_cnhw(x_cnhw, KH, KW, stride, pad)   # [Kp, M]
    patches = patches.astype(jnp.bfloat16)
    kdim, m = patches.shape
    assert kdim == kp, (kdim, kp)

    use_bias = bias is not None
    use_bn = bn_params is not None
    fuse_head = head is not None

    # BN needs full-M batch statistics resident in one block; the non-BN
    # layer (layer 1, largest M) tiles M and runs a parallel grid.
    tm = m if use_bn else min(m, 512)
    if m % tm:
        tm = m
    grid = (m // tm,)

    inputs = [w_gemm, patches]
    in_specs = [
        pl.BlockSpec((cout, kp), lambda i: (0, 0)),
        pl.BlockSpec((kp, tm), lambda i: (0, i)),
    ]
    if use_bias:
        inputs.append(bias)
        in_specs.append(pl.BlockSpec((cout, 1), lambda i: (0, 0)))
    if use_bn:
        gamma, beta = bn_params
        inputs += [gamma, beta]
        in_specs += [pl.BlockSpec((cout, 1), lambda i: (0, 0)),
                     pl.BlockSpec((cout, 1), lambda i: (0, 0))]
    if fuse_head:
        w5_tiled, gsum = head                          # [Cout, M] f32, [M, N] f32
        inputs += [w5_tiled, gsum]
        in_specs += [pl.BlockSpec((cout, m), lambda i: (0, 0)),
                     pl.BlockSpec((m, n), lambda i: (0, 0))]
        out_shape = jax.ShapeDtypeStruct((1, n), jnp.float32)
        out_spec = pl.BlockSpec((1, n), lambda i: (0, 0))
        out_bytes = n * 4
    else:
        # BN layers: whole-M block, bf16 output (lane-dense full-width stores).
        # Tiled layer 1 keeps an f32 output (sublane dim = Cout = nf).
        out_dtype = jnp.bfloat16 if use_bn else jnp.float32
        out_shape = jax.ShapeDtypeStruct((cout, m), out_dtype)
        out_spec = pl.BlockSpec((cout, tm), lambda i: (0, i))
        out_bytes = cout * m * (2 if out_dtype == jnp.bfloat16 else 4)

    cost = pl.CostEstimate(
        flops=2 * cout * kp * m,
        transcendentals=cout if use_bn else 0,
        bytes_accessed=int(w_gemm.size) * 2 + int(patches.size) * 2 + out_bytes)

    y = pl.pallas_call(
        _make_layer_kernel(use_bias, use_bn, act, fuse_head),
        out_shape=out_shape,
        grid=grid,
        in_specs=in_specs,
        out_specs=out_spec,
        compiler_params=pltpu.CompilerParams(
            dimension_semantics=("parallel",) if grid[0] > 1 else ("arbitrary",)),
        cost_estimate=cost,
    )(*inputs)

    if fuse_head:
        return y                                   # logits [1, N]
    return y.reshape(cout, n, ho, wo)              # stay channel-major


# ----------------------------------------------------------------------------
# Parameters (PyTorch-style raw init) + GEMM-ready preparation (done once)
# ----------------------------------------------------------------------------
def init_params(key, num_feature_maps, channels=3):
    nf = num_feature_maps
    ks = jax.random.split(key, 6)

    def conv_w(k, cout, cin):
        fan_in = cin * KH * KW
        bound = 1.0 / (fan_in ** 0.5)              # PyTorch default Conv2d init
        return jax.random.uniform(k, (cout, cin, KH, KW), jnp.float32, -bound, bound)

    b1_bound = 1.0 / ((channels * KH * KW) ** 0.5)
    return {
        "w1": conv_w(ks[0], nf, channels),
        "b1": jax.random.uniform(ks[5], (nf,), jnp.float32, -b1_bound, b1_bound),
        "w2": conv_w(ks[1], nf * 2, nf),
        "g2": jnp.ones((nf * 2,), jnp.float32), "be2": jnp.zeros((nf * 2,), jnp.float32),
        "w3": conv_w(ks[2], nf * 4, nf * 2),
        "g3": jnp.ones((nf * 4,), jnp.float32), "be3": jnp.zeros((nf * 4,), jnp.float32),
        "w4": conv_w(ks[3], nf * 8, nf * 4),
        "g4": jnp.ones((nf * 8,), jnp.float32), "be4": jnp.zeros((nf * 8,), jnp.float32),
        "w5": conv_w(ks[4], 1, nf * 8),
    }


def prepare_gemm_params(params):
    """Hoisted out of the forward pass: reshape/pad/cast params for the kernels."""
    channels = params["w1"].shape[1]
    cin_p = _round_up(channels, 8)                 # K1 = cin_p*16 -> lane aligned

    def wprep(w, pad_to=None):
        cout, cin, kh, kw = w.shape
        if pad_to is not None and pad_to != cin:
            w = jnp.pad(w, ((0, 0), (0, pad_to - cin), (0, 0), (0, 0)))
            cin = pad_to
        return w.reshape(cout, cin * kh * kw).astype(jnp.bfloat16)

    def col(v):
        return v.reshape(-1, 1).astype(jnp.float32)

    c4 = params["w5"].shape[1]
    return {
        "w1": wprep(params["w1"], pad_to=cin_p), "b1": col(params["b1"]),
        "w2": wprep(params["w2"]), "g2": col(params["g2"]), "be2": col(params["be2"]),
        "w3": wprep(params["w3"]), "g3": col(params["g3"]), "be3": col(params["be3"]),
        "w4": wprep(params["w4"]), "g4": col(params["g4"]), "be4": col(params["be4"]),
        # layer-5 head (Cout=1): kept f32, fused into layer 4's kernel.
        "w5r": params["w5"].reshape(c4, KH * KW).astype(jnp.float32),
    }


# ----------------------------------------------------------------------------
# Forward
# ----------------------------------------------------------------------------
def discriminator_forward(gemm_params, img):
    """img: [N, channels, 64, 64] NCHW -> logits [N, 1]."""
    n, cin, _, _ = img.shape
    cin_p = _round_up(cin, 8)
    # channel-major activations, channel-padded so K1 is a multiple of 128
    x = jnp.pad(img, ((0, 0), (0, cin_p - cin), (0, 0), (0, 0)))
    x = x.transpose(1, 0, 2, 3)                                    # [Cin_p, N, H, W]

    p = gemm_params
    x = conv_block(x, p["w1"], stride=2, pad=1, bias=p["b1"], act=True)
    x = conv_block(x, p["w2"], stride=2, pad=1,
                   bn_params=(p["g2"], p["be2"]), act=True)
    x = conv_block(x, p["w3"], stride=2, pad=1,
                   bn_params=(p["g3"], p["be3"]), act=True)

    # layer 4 with the final 4x4 valid conv (+ Flatten) fused in
    w5_tiled = jnp.tile(p["w5r"], (1, n))                          # [C4, N*16]
    gsum = jnp.repeat(jnp.eye(n, dtype=jnp.float32), KH * KW, axis=0)  # [N*16, N]
    logits = conv_block(x, p["w4"], stride=2, pad=1,
                        bn_params=(p["g4"], p["be4"]), act=True,
                        head=(w5_tiled, gsum))                     # [1, N]
    return logits.T                                                # [N, 1]


# ----------------------------------------------------------------------------
# Pure-JAX reference (for correctness check)
# ----------------------------------------------------------------------------
def _ref_conv(x, w, stride, pad, bias=None):
    y = lax.conv_general_dilated(
        x, w, window_strides=(stride, stride),
        padding=((pad, pad), (pad, pad)),
        dimension_numbers=("NCHW", "OIHW", "NCHW"),
        precision=lax.Precision.HIGHEST)
    if bias is not None:
        y = y + bias.reshape(1, -1, 1, 1)
    return y


def _ref_bn(x, gamma, beta):
    mean = jnp.mean(x, axis=(0, 2, 3), keepdims=True)
    var = jnp.var(x, axis=(0, 2, 3), keepdims=True)
    xn = (x - mean) * lax.rsqrt(var + BN_EPS)
    return xn * gamma.reshape(1, -1, 1, 1) + beta.reshape(1, -1, 1, 1)


def _ref_lrelu(x):
    return jnp.where(x >= 0, x, LEAKY_SLOPE * x)


def reference_forward(params, img):
    x = _ref_lrelu(_ref_conv(img, params["w1"], 2, 1, params["b1"]))
    x = _ref_lrelu(_ref_bn(_ref_conv(x, params["w2"], 2, 1), params["g2"], params["be2"]))
    x = _ref_lrelu(_ref_bn(_ref_conv(x, params["w3"], 2, 1), params["g3"], params["be3"]))
    x = _ref_lrelu(_ref_bn(_ref_conv(x, params["w4"], 2, 1), params["g4"], params["be4"]))
    x = _ref_conv(x, params["w5"], 1, 0)
    return x.reshape(x.shape[0], -1)


# ----------------------------------------------------------------------------
if __name__ == "__main__":
    # 4 stride-2 convs + a 4x4 valid conv require spatial 64 (64->32->16->8->4->1).
    batch, channels, hw = 2, 3, 64
    num_feature_maps = 8

    key = jax.random.PRNGKey(0)
    k_img, k_par = jax.random.split(key)
    img = jax.random.normal(k_img, (batch, channels, hw, hw), jnp.float32)
    params = init_params(k_par, num_feature_maps, channels)

    gemm_params = jax.block_until_ready(prepare_gemm_params(params))

    logits = jax.jit(discriminator_forward)(gemm_params, img)
    logits = jax.block_until_ready(logits)

    assert logits.shape == (batch, 1), logits.shape
    assert bool(jnp.all(jnp.isfinite(logits)))

    ref = jax.jit(reference_forward)(params, img)
    ref = jax.block_until_ready(ref)
    # bf16 MXU operands (fp32 accumulation) vs fp32 HIGHEST reference.
    assert bool(jnp.allclose(logits, ref, atol=5e-2, rtol=5e-2)), (logits, ref)

    print("KERNEL_OK")
</pallas_src>

<mosaic_0001>
module attributes {stable_mosaic.version = 11 : i64} {
  func.func @kernel(%arg0: i32, %arg1: memref<8x128xbf16, #tpu.memory_space<vmem>>, %arg2: memref<128x512xbf16, #tpu.memory_space<vmem>>, %arg3: memref<8x1xf32, #tpu.memory_space<vmem>>, %arg4: memref<8x512xf32, #tpu.memory_space<vmem>>) attributes {dimension_semantics = [#tpu.dimension_semantics<parallel>], iteration_bounds = array<i64: 4>, scalar_prefetch = 0 : i64, scratch_operands = 0 : i64, tpu.core_type = #tpu.core_type<tc>, window_params = [{pipeline_mode = #tpu.pipeline_mode<synchronous>, transform_indices = @transform_0, window_bounds = array<i64: 8, 128>}, {transform_indices = @transform_1, window_bounds = array<i64: 128, 512>}, {pipeline_mode = #tpu.pipeline_mode<synchronous>, transform_indices = @transform_2, window_bounds = array<i64: 8, 1>}, {transform_indices = @transform_3, window_bounds = array<i64: 8, 512>}]} {
    %c0 = arith.constant 0 : index
    %c0_0 = arith.constant 0 : index
    %0 = vector.load %arg1[%c0, %c0_0] : memref<8x128xbf16, #tpu.memory_space<vmem>>, vector<8x128xbf16>
    %c0_1 = arith.constant 0 : index
    %c0_2 = arith.constant 0 : index
    %1 = vector.load %arg2[%c0_1, %c0_2] : memref<128x512xbf16, #tpu.memory_space<vmem>>, vector<128x512xbf16>
    %cst = arith.constant dense<0.000000e+00> : vector<8x512xf32>
    %2 = tpu.matmul %0, %1, %cst {dimension_numbers = #tpu.dot_dimension_numbers<[1], [0], [0], [1], [0, 0, 1, 1], [], []>} : vector<8x128xbf16>, vector<128x512xbf16>, vector<8x512xf32> -> vector<8x512xf32>
    %c0_3 = arith.constant 0 : index
    %c0_4 = arith.constant 0 : index
    %3 = vector.load %arg3[%c0_3, %c0_4] : memref<8x1xf32, #tpu.memory_space<vmem>>, vector<8x1xf32>
    %4 = vector.broadcast %3 : vector<8x1xf32> to vector<8x512xf32>
    %5 = arith.addf %2, %4 : vector<8x512xf32>
    %cst_5 = arith.constant 0.000000e+00 : f32
    %6 = vector.broadcast %cst_5 : f32 to vector<8x512xf32>
    %7 = arith.cmpf oge, %5, %6 : vector<8x512xf32>
    %cst_6 = arith.constant 0.00999999977 : f32
    %8 = vector.broadcast %cst_6 : f32 to vector<8x512xf32>
    %9 = arith.mulf %8, %5 : vector<8x512xf32>
    %10 = arith.select %7, %5, %9 : vector<8x512xi1>, vector<8x512xf32>
    %c0_7 = arith.constant 0 : index
    %c0_8 = arith.constant 0 : index
    %11 = vector.load %arg4[%c0_7, %c0_8] : memref<8x512xf32, #tpu.memory_space<vmem>>, vector<8x512xf32>
    tpu.vector_store %arg4[%c0_7, %c0_8], %10 {strides = array<i32>} : memref<8x512xf32, #tpu.memory_space<vmem>>, vector<8x512xf32>,
    return
  }
  func.func @transform_0(%arg0: i32) -> (i32, i32) {
    %c0_i32 = arith.constant 0 : i32
    %c0_i32_0 = arith.constant 0 : i32
    %c0_i32_1 = arith.constant 0 : i32
    return %c0_i32, %c0_i32_0 : i32, i32
  }
  func.func @transform_1(%arg0: i32) -> (i32, i32) {
    %c0_i32 = arith.constant 0 : i32
    %c0_i32_0 = arith.constant 0 : i32
    return %c0_i32, %arg0 : i32, i32
  }
  func.func @transform_2(%arg0: i32) -> (i32, i32) {
    %c0_i32 = arith.constant 0 : i32
    %c0_i32_0 = arith.constant 0 : i32
    %c0_i32_1 = arith.constant 0 : i32
    return %c0_i32, %c0_i32_0 : i32, i32
  }
  func.func @transform_3(%arg0: i32) -> (i32, i32) {
    %c0_i32 = arith.constant 0 : i32
    %c0_i32_0 = arith.constant 0 : i32
    return %c0_i32, %arg0 : i32, i32
  }
}

module attributes {stable_mosaic.version = 11 : i64} {
  func.func @kernel(%arg0: i32, %arg1: memref<16x128xbf16, #tpu.memory_space<vmem>>, %arg2: memref<128x512xbf16, #tpu.memory_space<vmem>>, %arg3: memref<16x1xf32, #tpu.memory_space<vmem>>, %arg4: memref<16x1xf32, #tpu.memory_space<vmem>>, %arg5: memref<16x512xbf16, #tpu.memory_space<vmem>>) attributes {dimension_semantics = [#tpu.dimension_semantics<arbitrary>], iteration_bounds = array<i64: 1>, scalar_prefetch = 0 : i64, scratch_operands = 0 : i64, tpu.core_type = #tpu.core_type<tc>, window_params = [{pipeline_mode = #tpu.pipeline_mode<synchronous>, transform_indices = @transform_0, window_bounds = array<i64: 16, 128>}, {transform_indices = @transform_1, window_bounds = array<i64: 128, 512>}, {pipeline_mode = #tpu.pipeline_mode<synchronous>, transform_indices = @transform_2, window_bounds = array<i64: 16, 1>}, {pipeline_mode = #tpu.pipeline_mode<synchronous>, transform_indices = @transform_3, window_bounds = array<i64: 16, 1>}, {transform_indices = @transform_4, window_bounds = array<i64: 16, 512>}]} {
    %c0 = arith.constant 0 : index
    %c0_0 = arith.constant 0 : index
    %0 = vector.load %arg1[%c0, %c0_0] : memref<16x128xbf16, #tpu.memory_space<vmem>>, vector<16x128xbf16>
    %c0_1 = arith.constant 0 : index
    %c0_2 = arith.constant 0 : index
    %1 = vector.load %arg2[%c0_1, %c0_2] : memref<128x512xbf16, #tpu.memory_space<vmem>>, vector<128x512xbf16>
    %cst = arith.constant dense<0.000000e+00> : vector<16x512xf32>
    %2 = tpu.matmul %0, %1, %cst {dimension_numbers = #tpu.dot_dimension_numbers<[1], [0], [0], [1], [0, 0, 1, 1], [], []>} : vector<16x128xbf16>, vector<128x512xbf16>, vector<16x512xf32> -> vector<16x512xf32>
    %cst_3 = arith.constant dense<0.000000e+00> : vector<16xf32>
    %3 = vector.multi_reduction <add>, %2, %cst_3 [1] : vector<16x512xf32> to vector<16xf32>
    %4 = vector.shape_cast %3 : vector<16xf32> to vector<16x1xf32>
    %cst_4 = arith.constant 5.120000e+02 : f32
    %5 = vector.broadcast %cst_4 : f32 to vector<16x1xf32>
    %6 = arith.divf %4, %5 : vector<16x1xf32>
    %7 = vector.broadcast %6 : vector<16x1xf32> to vector<16x512xf32>
    %8 = arith.subf %2, %7 : vector<16x512xf32>
    %9 = arith.mulf %8, %8 : vector<16x512xf32>
    %cst_5 = arith.constant dense<0.000000e+00> : vector<16xf32>
    %10 = vector.multi_reduction <add>, %9, %cst_5 [1] : vector<16x512xf32> to vector<16xf32>
    %11 = vector.shape_cast %10 : vector<16xf32> to vector<16x1xf32>
    %cst_6 = arith.constant 5.120000e+02 : f32
    %12 = vector.broadcast %cst_6 : f32 to vector<16x1xf32>
    %13 = arith.divf %11, %12 : vector<16x1xf32>
    %cst_7 = arith.constant 9.99999974E-6 : f32
    %14 = vector.broadcast %cst_7 : f32 to vector<16x1xf32>
    %15 = arith.addf %13, %14 : vector<16x1xf32>
    %16 = math.rsqrt %15 : vector<16x1xf32>
    %17 = vector.broadcast %16 : vector<16x1xf32> to vector<16x512xf32>
    %18 = arith.mulf %8, %17 : vector<16x512xf32>
    %c0_8 = arith.constant 0 : index
    %c0_9 = arith.constant 0 : index
    %19 = vector.load %arg3[%c0_8, %c0_9] : memref<16x1xf32, #tpu.memory_space<vmem>>, vector<16x1xf32>
    %20 = vector.broadcast %19 : vector<16x1xf32> to vector<16x512xf32>
    %21 = arith.mulf %18, %20 : vector<16x512xf32>
    %c0_10 = arith.constant 0 : index
    %c0_11 = arith.constant 0 : index
    %22 = vector.load %arg4[%c0_10, %c0_11] : memref<16x1xf32, #tpu.memory_space<vmem>>, vector<16x1xf32>
    %23 = vector.broadcast %22 : vector<16x1xf32> to vector<16x512xf32>
    %24 = arith.addf %21, %23 : vector<16x512xf32>
    %cst_12 = arith.constant 0.000000e+00 : f32
    %25 = vector.broadcast %cst_12 : f32 to vector<16x512xf32>
    %26 = arith.cmpf oge, %24, %25 : vector<16x512xf32>
    %cst_13 = arith.constant 0.00999999977 : f32
    %27 = vector.broadcast %cst_13 : f32 to vector<16x512xf32>
    %28 = arith.mulf %27, %24 : vector<16x512xf32>
    %29 = arith.select %26, %24, %28 : vector<16x512xi1>, vector<16x512xf32>
    %30 = arith.truncf %29 : vector<16x512xf32> to vector<16x512xbf16>
    %c0_14 = arith.constant 0 : index
    %c0_15 = arith.constant 0 : index
    %31 = vector.load %arg5[%c0_14, %c0_15] : memref<16x512xbf16, #tpu.memory_space<vmem>>, vector<16x512xbf16>
    tpu.vector_store %arg5[%c0_14, %c0_15], %30 {strides = array<i32>} : memref<16x512xbf16, #tpu.memory_space<vmem>>, vector<16x512xbf16>,
    return
  }
  func.func @transform_0(%arg0: i32) -> (i32, i32) {
    %c0_i32 = arith.constant 0 : i32
    %c0_i32_0 = arith.constant 0 : i32
    %c0_i32_1 = arith.constant 0 : i32
    return %c0_i32, %c0_i32_0 : i32, i32
  }
  func.func @transform_1(%arg0: i32) -> (i32, i32) {
    %c0_i32 = arith.constant 0 : i32
    %c0_i32_0 = arith.constant 0 : i32
    return %c0_i32, %arg0 : i32, i32
  }
  func.func @transform_2(%arg0: i32) -> (i32, i32) {
    %c0_i32 = arith.constant 0 : i32
    %c0_i32_0 = arith.constant 0 : i32
    %c0_i32_1 = arith.constant 0 : i32
    return %c0_i32, %c0_i32_0 : i32, i32
  }
  func.func @transform_3(%arg0: i32) -> (i32, i32) {
    %c0_i32 = arith.constant 0 : i32
    %c0_i32_0 = arith.constant 0 : i32
    %c0_i32_1 = arith.constant 0 : i32
    return %c0_i32, %c0_i32_0 : i32, i32
  }
  func.func @transform_4(%arg0: i32) -> (i32, i32) {
    %c0_i32 = arith.constant 0 : i32
    %c0_i32_0 = arith.constant 0 : i32
    return %c0_i32, %arg0 : i32, i32
  }
}

module attributes {stable_mosaic.version = 11 : i64} {
  func.func @kernel(%arg0: i32, %arg1: memref<32x256xbf16, #tpu.memory_space<vmem>>, %arg2: memref<256x128xbf16, #tpu.memory_space<vmem>>, %arg3: memref<32x1xf32, #tpu.memory_space<vmem>>, %arg4: memref<32x1xf32, #tpu.memory_space<vmem>>, %arg5: memref<32x128xbf16, #tpu.memory_space<vmem>>) attributes {dimension_semantics = [#tpu.dimension_semantics<arbitrary>], iteration_bounds = array<i64: 1>, scalar_prefetch = 0 : i64, scratch_operands = 0 : i64, tpu.core_type = #tpu.core_type<tc>, window_params = [{pipeline_mode = #tpu.pipeline_mode<synchronous>, transform_indices = @transform_0, window_bounds = array<i64: 32, 256>}, {transform_indices = @transform_1, window_bounds = array<i64: 256, 128>}, {pipeline_mode = #tpu.pipeline_mode<synchronous>, transform_indices = @transform_2, window_bounds = array<i64: 32, 1>}, {pipeline_mode = #tpu.pipeline_mode<synchronous>, transform_indices = @transform_3, window_bounds = array<i64: 32, 1>}, {transform_indices = @transform_4, window_bounds = array<i64: 32, 128>}]} {
    %c0 = arith.constant 0 : index
    %c0_0 = arith.constant 0 : index
    %0 = vector.load %arg1[%c0, %c0_0] : memref<32x256xbf16, #tpu.memory_space<vmem>>, vector<32x256xbf16>
    %c0_1 = arith.constant 0 : index
    %c0_2 = arith.constant 0 : index
    %1 = vector.load %arg2[%c0_1, %c0_2] : memref<256x128xbf16, #tpu.memory_space<vmem>>, vector<256x128xbf16>
    %cst = arith.constant dense<0.000000e+00> : vector<32x128xf32>
    %2 = tpu.matmul %0, %1, %cst {dimension_numbers = #tpu.dot_dimension_numbers<[1], [0], [0], [1], [0, 0, 1, 1], [], []>} : vector<32x256xbf16>, vector<256x128xbf16>, vector<32x128xf32> -> vector<32x128xf32>
    %cst_3 = arith.constant dense<0.000000e+00> : vector<32xf32>
    %3 = vector.multi_reduction <add>, %2, %cst_3 [1] : vector<32x128xf32> to vector<32xf32>
    %4 = vector.shape_cast %3 : vector<32xf32> to vector<32x1xf32>
    %cst_4 = arith.constant 1.280000e+02 : f32
    %5 = vector.broadcast %cst_4 : f32 to vector<32x1xf32>
    %6 = arith.divf %4, %5 : vector<32x1xf32>
    %7 = vector.broadcast %6 : vector<32x1xf32> to vector<32x128xf32>
    %8 = arith.subf %2, %7 : vector<32x128xf32>
    %9 = arith.mulf %8, %8 : vector<32x128xf32>
    %cst_5 = arith.constant dense<0.000000e+00> : vector<32xf32>
    %10 = vector.multi_reduction <add>, %9, %cst_5 [1] : vector<32x128xf32> to vector<32xf32>
    %11 = vector.shape_cast %10 : vector<32xf32> to vector<32x1xf32>
    %cst_6 = arith.constant 1.280000e+02 : f32
    %12 = vector.broadcast %cst_6 : f32 to vector<32x1xf32>
    %13 = arith.divf %11, %12 : vector<32x1xf32>
    %cst_7 = arith.constant 9.99999974E-6 : f32
    %14 = vector.broadcast %cst_7 : f32 to vector<32x1xf32>
    %15 = arith.addf %13, %14 : vector<32x1xf32>
    %16 = math.rsqrt %15 : vector<32x1xf32>
    %17 = vector.broadcast %16 : vector<32x1xf32> to vector<32x128xf32>
    %18 = arith.mulf %8, %17 : vector<32x128xf32>
    %c0_8 = arith.constant 0 : index
    %c0_9 = arith.constant 0 : index
    %19 = vector.load %arg3[%c0_8, %c0_9] : memref<32x1xf32, #tpu.memory_space<vmem>>, vector<32x1xf32>
    %20 = vector.broadcast %19 : vector<32x1xf32> to vector<32x128xf32>
    %21 = arith.mulf %18, %20 : vector<32x128xf32>
    %c0_10 = arith.constant 0 : index
    %c0_11 = arith.constant 0 : index
    %22 = vector.load %arg4[%c0_10, %c0_11] : memref<32x1xf32, #tpu.memory_space<vmem>>, vector<32x1xf32>
    %23 = vector.broadcast %22 : vector<32x1xf32> to vector<32x128xf32>
    %24 = arith.addf %21, %23 : vector<32x128xf32>
    %cst_12 = arith.constant 0.000000e+00 : f32
    %25 = vector.broadcast %cst_12 : f32 to vector<32x128xf32>
    %26 = arith.cmpf oge, %24, %25 : vector<32x128xf32>
    %cst_13 = arith.constant 0.00999999977 : f32
    %27 = vector.broadcast %cst_13 : f32 to vector<32x128xf32>
    %28 = arith.mulf %27, %24 : vector<32x128xf32>
    %29 = arith.select %26, %24, %28 : vector<32x128xi1>, vector<32x128xf32>
    %30 = arith.truncf %29 : vector<32x128xf32> to vector<32x128xbf16>
    %c0_14 = arith.constant 0 : index
    %c0_15 = arith.constant 0 : index
    %31 = vector.load %arg5[%c0_14, %c0_15] : memref<32x128xbf16, #tpu.memory_space<vmem>>, vector<32x128xbf16>
    tpu.vector_store %arg5[%c0_14, %c0_15], %30 {strides = array<i32>} : memref<32x128xbf16, #tpu.memory_space<vmem>>, vector<32x128xbf16>,
    return
  }
  func.func @transform_0(%arg0: i32) -> (i32, i32) {
    %c0_i32 = arith.constant 0 : i32
    %c0_i32_0 = arith.constant 0 : i32
    %c0_i32_1 = arith.constant 0 : i32
    return %c0_i32, %c0_i32_0 : i32, i32
  }
  func.func @transform_1(%arg0: i32) -> (i32, i32) {
    %c0_i32 = arith.constant 0 : i32
    %c0_i32_0 = arith.constant 0 : i32
    return %c0_i32, %arg0 : i32, i32
  }
  func.func @transform_2(%arg0: i32) -> (i32, i32) {
    %c0_i32 = arith.constant 0 : i32
    %c0_i32_0 = arith.constant 0 : i32
    %c0_i32_1 = arith.constant 0 : i32
    return %c0_i32, %c0_i32_0 : i32, i32
  }
  func.func @transform_3(%arg0: i32) -> (i32, i32) {
    %c0_i32 = arith.constant 0 : i32
    %c0_i32_0 = arith.constant 0 : i32
    %c0_i32_1 = arith.constant 0 : i32
    return %c0_i32, %c0_i32_0 : i32, i32
  }
  func.func @transform_4(%arg0: i32) -> (i32, i32) {
    %c0_i32 = arith.constant 0 : i32
    %c0_i32_0 = arith.constant 0 : i32
    return %c0_i32, %arg0 : i32, i32
  }
}

module attributes {stable_mosaic.version = 11 : i64} {
  func.func @kernel(%arg0: i32, %arg1: memref<64x512xbf16, #tpu.memory_space<vmem>>, %arg2: memref<512x32xbf16, #tpu.memory_space<vmem>>, %arg3: memref<64x1xf32, #tpu.memory_space<vmem>>, %arg4: memref<64x1xf32, #tpu.memory_space<vmem>>, %arg5: memref<64x32xf32, #tpu.memory_space<vmem>>, %arg6: memref<32x2xf32, #tpu.memory_space<vmem>>, %arg7: memref<1x2xf32, #tpu.memory_space<vmem>>) attributes {dimension_semantics = [#tpu.dimension_semantics<arbitrary>], iteration_bounds = array<i64: 1>, scalar_prefetch = 0 : i64, scratch_operands = 0 : i64, tpu.core_type = #tpu.core_type<tc>, window_params = [{pipeline_mode = #tpu.pipeline_mode<synchronous>, transform_indices = @transform_0, window_bounds = array<i64: 64, 512>}, {transform_indices = @transform_1, window_bounds = array<i64: 512, 32>}, {pipeline_mode = #tpu.pipeline_mode<synchronous>, transform_indices = @transform_2, window_bounds = array<i64: 64, 1>}, {pipeline_mode = #tpu.pipeline_mode<synchronous>, transform_indices = @transform_3, window_bounds = array<i64: 64, 1>}, {pipeline_mode = #tpu.pipeline_mode<synchronous>, transform_indices = @transform_4, window_bounds = array<i64: 64, 32>}, {pipeline_mode = #tpu.pipeline_mode<synchronous>, transform_indices = @transform_5, window_bounds = array<i64: 32, 2>}, {pipeline_mode = #tpu.pipeline_mode<synchronous>, transform_indices = @transform_6, window_bounds = array<i64: 1, 2>}]} {
    %c0 = arith.constant 0 : index
    %c0_0 = arith.constant 0 : index
    %0 = vector.load %arg1[%c0, %c0_0] : memref<64x512xbf16, #tpu.memory_space<vmem>>, vector<64x512xbf16>
    %c0_1 = arith.constant 0 : index
    %c0_2 = arith.constant 0 : index
    %1 = vector.load %arg2[%c0_1, %c0_2] : memref<512x32xbf16, #tpu.memory_space<vmem>>, vector<512x32xbf16>
    %cst = arith.constant dense<0.000000e+00> : vector<64x32xf32>
    %2 = tpu.matmul %0, %1, %cst {dimension_numbers = #tpu.dot_dimension_numbers<[1], [0], [0], [1], [0, 0, 1, 1], [], []>} : vector<64x512xbf16>, vector<512x32xbf16>, vector<64x32xf32> -> vector<64x32xf32>
    %cst_3 = arith.constant dense<0.000000e+00> : vector<64xf32>
    %3 = vector.multi_reduction <add>, %2, %cst_3 [1] : vector<64x32xf32> to vector<64xf32>
    %4 = vector.shape_cast %3 : vector<64xf32> to vector<64x1xf32>
    %cst_4 = arith.constant 3.200000e+01 : f32
    %5 = vector.broadcast %cst_4 : f32 to vector<64x1xf32>
    %6 = arith.divf %4, %5 : vector<64x1xf32>
    %7 = vector.broadcast %6 : vector<64x1xf32> to vector<64x32xf32>
    %8 = arith.subf %2, %7 : vector<64x32xf32>
    %9 = arith.mulf %8, %8 : vector<64x32xf32>
    %cst_5 = arith.constant dense<0.000000e+00> : vector<64xf32>
    %10 = vector.multi_reduction <add>, %9, %cst_5 [1] : vector<64x32xf32> to vector<64xf32>
    %11 = vector.shape_cast %10 : vector<64xf32> to vector<64x1xf32>
    %cst_6 = arith.constant 3.200000e+01 : f32
    %12 = vector.broadcast %cst_6 : f32 to vector<64x1xf32>
    %13 = arith.divf %11, %12 : vector<64x1xf32>
    %cst_7 = arith.constant 9.99999974E-6 : f32
    %14 = vector.broadcast %cst_7 : f32 to vector<64x1xf32>
    %15 = arith.addf %13, %14 : vector<64x1xf32>
    %16 = math.rsqrt %15 : vector<64x1xf32>
    %17 = vector.broadcast %16 : vector<64x1xf32> to vector<64x32xf32>
    %18 = arith.mulf %8, %17 : vector<64x32xf32>
    %c0_8 = arith.constant 0 : index
    %c0_9 = arith.constant 0 : index
    %19 = vector.load %arg3[%c0_8, %c0_9] : memref<64x1xf32, #tpu.memory_space<vmem>>, vector<64x1xf32>
    %20 = vector.broadcast %19 : vector<64x1xf32> to vector<64x32xf32>
    %21 = arith.mulf %18, %20 : vector<64x32xf32>
    %c0_10 = arith.constant 0 : index
    %c0_11 = arith.constant 0 : index
    %22 = vector.load %arg4[%c0_10, %c0_11] : memref<64x1xf32, #tpu.memory_space<vmem>>, vector<64x1xf32>
    %23 = vector.broadcast %22 : vector<64x1xf32> to vector<64x32xf32>
    %24 = arith.addf %21, %23 : vector<64x32xf32>
    %cst_12 = arith.constant 0.000000e+00 : f32
    %25 = vector.broadcast %cst_12 : f32 to vector<64x32xf32>
    %26 = arith.cmpf oge, %24, %25 : vector<64x32xf32>
    %cst_13 = arith.constant 0.00999999977 : f32
    %27 = vector.broadcast %cst_13 : f32 to vector<64x32xf32>
    %28 = arith.mulf %27, %24 : vector<64x32xf32>
    %29 = arith.select %26, %24, %28 : vector<64x32xi1>, vector<64x32xf32>
    %c0_14 = arith.constant 0 : index
    %c0_15 = arith.constant 0 : index
    %30 = vector.load %arg5[%c0_14, %c0_15] : memref<64x32xf32, #tpu.memory_space<vmem>>, vector<64x32xf32>
    %31 = arith.mulf %29, %30 : vector<64x32xf32>
    %cst_16 = arith.constant dense<0.000000e+00> : vector<32xf32>
    %32 = vector.multi_reduction <add>, %31, %cst_16 [0] : vector<64x32xf32> to vector<32xf32>
    %33 = vector.shape_cast %32 : vector<32xf32> to vector<1x32xf32>
    %c0_17 = arith.constant 0 : index
    %c0_18 = arith.constant 0 : index
    %34 = vector.load %arg6[%c0_17, %c0_18] : memref<32x2xf32, #tpu.memory_space<vmem>>, vector<32x2xf32>
    %cst_19 = arith.constant dense<0.000000e+00> : vector<1x2xf32>
    %35 = tpu.matmul %33, %34, %cst_19 {dimension_numbers = #tpu.dot_dimension_numbers<[1], [0], [0], [1], [0, 0, 1, 1], [], []>} : vector<1x32xf32>, vector<32x2xf32>, vector<1x2xf32> -> vector<1x2xf32>
    %c0_20 = arith.constant 0 : index
    %c0_21 = arith.constant 0 : index
    %36 = vector.load %arg7[%c0_20, %c0_21] : memref<1x2xf32, #tpu.memory_space<vmem>>, vector<1x2xf32>
    tpu.vector_store %arg7[%c0_20, %c0_21], %35 {strides = array<i32>} : memref<1x2xf32, #tpu.memory_space<vmem>>, vector<1x2xf32>,
    return
  }
  func.func @transform_0(%arg0: i32) -> (i32, i32) {
    %c0_i32 = arith.constant 0 : i32
    %c0_i32_0 = arith.constant 0 : i32
    %c0_i32_1 = arith.constant 0 : i32
    return %c0_i32, %c0_i32_0 : i32, i32
  }
  func.func @transform_1(%arg0: i32) -> (i32, i32) {
    %c0_i32 = arith.constant 0 : i32
    %c0_i32_0 = arith.constant 0 : i32
    return %c0_i32, %arg0 : i32, i32
  }
  func.func @transform_2(%arg0: i32) -> (i32, i32) {
    %c0_i32 = arith.constant 0 : i32
    %c0_i32_0 = arith.constant 0 : i32
    %c0_i32_1 = arith.constant 0 : i32
    return %c0_i32, %c0_i32_0 : i32, i32
  }
  func.func @transform_3(%arg0: i32) -> (i32, i32) {
    %c0_i32 = arith.constant 0 : i32
    %c0_i32_0 = arith.constant 0 : i32
    %c0_i32_1 = arith.constant 0 : i32
    return %c0_i32, %c0_i32_0 : i32, i32
  }
  func.func @transform_4(%arg0: i32) -> (i32, i32) {
    %c0_i32 = arith.constant 0 : i32
    %c0_i32_0 = arith.constant 0 : i32
    %c0_i32_1 = arith.constant 0 : i32
    return %c0_i32, %c0_i32_0 : i32, i32
  }
  func.func @transform_5(%arg0: i32) -> (i32, i32) {
    %c0_i32 = arith.constant 0 : i32
    %c0_i32_0 = arith.constant 0 : i32
    %c0_i32_1 = arith.constant 0 : i32
    return %c0_i32, %c0_i32_0 : i32, i32
  }
  func.func @transform_6(%arg0: i32) -> (i32, i32) {
    %c0_i32 = arith.constant 0 : i32
    %c0_i32_0 = arith.constant 0 : i32
    %c0_i32_1 = arith.constant 0 : i32
    return %c0_i32, %c0_i32_0 : i32, i32
  }
}

</mosaic_0001>

<llo_original>
// kernel: discriminator_forward.4
$region0: #{discriminator_forward.4}
  #allocation0 [shape = 'u32[]', space=smem, size = 0x4, offset = 0x4, fixed_abs, tag = 'smem constant byte address 0x4 - core index']
  #allocation1 [shape = 'u32[144,128]{1,0:T(1,128)}', space=vmem, size = 0x12000, scoped, tag = 'internal scratch']
  %s0 = inlined_call_operand.vmem [shape: bf16[8,128], index: 0, kind: input, shape index: {}]
  %s1 = inlined_call_operand.vmem [shape: bf16[128,2048], index: 1, kind: input, shape index: {}]
  %s2 = inlined_call_operand.vmem [shape: f32[8,1], index: 2, kind: input, shape index: {}]
  %s3 = inlined_call_operand.vmem [shape: f32[8,2048], index: 3, kind: output, shape index: {}]
  %s4 = sld [smem:[#allocation0]]
  $region68: #{discriminator_forward.4} parent=0
    _
  %s6 = ssub.s32 1, %s4
  %s7 = scalar_select 0, %s6, %s4
  $region1: #{discriminator_forward.4} parent=0
    #allocation2 [shape = 'u8[262144]{0}', space=vmem, size = 0x40000, scoped, tag = 'input window, operand 1']
    loop: start=0, step=1, limit=6
    $region2: #{discriminator_forward.4} parent=1 // loop_pre_header
      _
    $region3: #{discriminator_forward.4} parent=1 // loop_header
      %s9 = sphi 0, %s13
      %p10 = scmp.ge.s32.totalorder %s9, 6
      %s17 = sphi 0, %s17
      %s19 = sphi 0, %s17
      %s20 = sphi 0, %s19
      %s34 = sphi 0, %s20
      %s40 = sphi 0, %s42
      %s43 = sphi 0, %s40
      %s44 = sphi 0, %s43
      %s60 = sphi 0, %s44
      %s64 = sphi 0, %s64
      %s66 = sphi 0, %s64
      %s67 = sphi 0, %s66
      %s81 = sphi 0, %s67
      %s87 = sphi 0, %s89
      %s90 = sphi 0, %s87
      %s91 = sphi 0, %s90
      %s107 = sphi 0, %s91
    $region4: #{discriminator_forward.4} parent=1 // loop_header_branch
      %12 = sbr.rel (%p10) target = $region8
    $region5: #{discriminator_forward.4} parent=1 // loop_body
      %s14 = ssub.s32 %s9, 1
      %s15 = ssub.s32 %s9, 2
      %s16 = sadd.s32 %s9, 1
      %s18 = sadd.s32 %s17, 1
      %p21 = scmp.eq.s32.totalorder %s9, 3
      %p22 = scmp.ne.s32.totalorder %s17, %s19
      %p23 = scmp.eq.s32.totalorder %s9, 0
      %p24 = por %p22, %p23
      %p25 = scmp.ne.s32.totalorder %s17, %s19
      %p26 = scmp.eq.s32.totalorder %s14, 3
      %p27 = por %p25, %p26
      %p28 = scmp.ne.s32.totalorder %s19, %s20
      %p29 = scmp.eq.s32.totalorder %s14, 0
      %p30 = por %p28, %p29
      %p31 = scmp.ne.s32.totalorder %s19, %s20
      %p32 = scmp.eq.s32.totalorder %s15, 3
      %p33 = por %p31, %p32
      %p35 = scmp.ne.s32.totalorder %s20, %s34
      %p36 = scmp.eq.s32.totalorder %s15, 0
      %p37 = por %p35, %p36
      %s38 = ssub.s32 %s9, %s16
      %p39 = scmp.eq.s32.totalorder %s38, 0
      %s41 = sadd.s32 %s40, 1
      %s42 = scalar_select %p39, %s40, %s41
      %p45 = pneg %p39
      %p46 = scmp.eq.s32.totalorder %s9, 3
      %p47 = por %p45, %p46
      %p48 = scmp.ne.s32.totalorder %s40, %s43
      %p49 = scmp.eq.s32.totalorder %s9, 0
      %p50 = por %p48, %p49
      %p51 = scmp.ne.s32.totalorder %s40, %s43
      %p52 = scmp.eq.s32.totalorder %s14, 3
      %p53 = por %p51, %p52
      %p54 = scmp.ne.s32.totalorder %s43, %s44
      %p55 = scmp.eq.s32.totalorder %s14, 0
      %p56 = por %p54, %p55
      %p57 = scmp.ne.s32.totalorder %s43, %s44
      %p58 = scmp.eq.s32.totalorder %s15, 3
      %p59 = por %p57, %p58
      %p61 = scmp.ne.s32.totalorder %s44, %s60
      %p62 = scmp.eq.s32.totalorder %s15, 0
      %p63 = por %p61, %p62
      %s65 = sadd.s32 %s64, 1
      %p68 = scmp.eq.s32.totalorder %s9, 3
      %p69 = scmp.ne.s32.totalorder %s64, %s66
      %p70 = scmp.eq.s32.totalorder %s9, 0
      %p71 = por %p69, %p70
      %p72 = scmp.ne.s32.totalorder %s64, %s66
      %p73 = scmp.eq.s32.totalorder %s14, 3
      %p74 = por %p72, %p73
      %p75 = scmp.ne.s32.totalorder %s66, %s67
      %p76 = scmp.eq.s32.totalorder %s14, 0
      %p77 = por %p75, %p76
      %p78 = scmp.ne.s32.totalorder %s66, %s67
      %p79 = scmp.eq.s32.totalorder %s15, 3
      %p80 = por %p78, %p79
      %p82 = scmp.ne.s32.totalorder %s67, %s81
      %p83 = scmp.eq.s32.totalorder %s15, 0
      %p84 = por %p82, %p83
      %s85 = ssub.s32 %s9, %s16
      %p86 = scmp.eq.s32.totalorder %s85, 0
      %s88 = sadd.s32 %s87, 1
      %s89 = scalar_select %p86, %s87, %s88
      %p92 = pneg %p86
      %p93 = scmp.eq.s32.totalorder %s9, 3
      %p94 = por %p92, %p93
      %p95 = scmp.ne.s32.totalorder %s87, %s90
      %p96 = scmp.eq.s32.totalorder %s9, 0
      %p97 = por %p95, %p96
      %p98 = scmp.ne.s32.totalorder %s87, %s90
      %p99 = scmp.eq.s32.totalorder %s14, 3
      %p100 = por %p98, %p99
      %p101 = scmp.ne.s32.totalorder %s90, %s91
      %p102 = scmp.eq.s32.totalorder %s14, 0
      %p103 = por %p101, %p102
      %p104 = scmp.ne.s32.totalorder %s90, %s91
      %p105 = scmp.eq.s32.totalorder %s15, 3
      %p106 = por %p104, %p105
      %p108 = scmp.ne.s32.totalorder %s91, %s107
      %p109 = scmp.eq.s32.totalorder %s15, 0
      %p110 = por %p108, %p109
      %p111 = scmp.le.s32.totalorder 1, %s9
      %p112 = scmp.lt.s32.totalorder %s9, 5
      %p113 = pnand %p111, %p112
      %p114 = pneg %p113
      // Predicated region
      $region9: #{discriminator_forward.4} parent=5 // pred_check
        _
      $region10: #{discriminator_forward.4} parent=5 // pred_check_branch
        %116 = sbr.rel (%p113) target = $region12
      $region11: #{discriminator_forward.4} parent=5 // pred_region
        %s117 = ssub.s32 %s9, 1
        // Predicated region
        $region13: #{discriminator_forward.4} parent=11 // pred_check
          %p118 = pneg %p30
        $region14: #{discriminator_forward.4} parent=11 // pred_check_branch
          %120 = sbr.rel (%p118) target = $region16
        $region15: #{discriminator_forward.4} parent=11 // pred_region
          _
        $region16: #{discriminator_forward.4} parent=11 // pred_fallthru
          _
        // Predicated region
        $region17: #{discriminator_forward.4} parent=11 // pred_check
          %p121 = pneg %p77
        $region18: #{discriminator_forward.4} parent=11 // pred_check_branch
          %123 = sbr.rel (%p121) target = $region20
        $region19: #{discriminator_forward.4} parent=11 // pred_region
          _
        $region20: #{discriminator_forward.4} parent=11 // pred_fallthru
          _
      $region12: #{discriminator_forward.4} parent=5 // pred_fallthru
        _
      %p124 = scmp.lt.s32.totalorder %s9, 4
      // Predicated region
      $region21: #{discriminator_forward.4} parent=5 // pred_check
        %p125 = pneg %p124
      $region22: #{discriminator_forward.4} parent=5 // pred_check_branch
        %127 = sbr.rel (%p125) target = $region24
      $region23: #{discriminator_forward.4} parent=5 // pred_region
        // Predicated region
        $region25: #{discriminator_forward.4} parent=23 // pred_check
          %p128 = pneg %p50
        $region26: #{discriminator_forward.4} parent=23 // pred_check_branch
          %130 = sbr.rel (%p128) target = $region28
        $region27: #{discriminator_forward.4} parent=23 // pred_region
          %s131 = sand.u32 %s40, 1
          %s132 = sand.u32 %s40, 1
          %s133 = smul.addr %s132, 256
          %s134 = scalar_lea.vmem [#allocation2], %s133
          %s135 = smul.u32 4, %s9
          %s136 = smul.addr %s135, 4
          %s137 = scalar_lea.vmem %s1, %s136
          // Predicated region
          $region29: #{discriminator_forward.4} parent=27 // pred_check
            _
          $region30: #{discriminator_forward.4} parent=27 // pred_check_branch
            %139 = sbr.rel (0) target = $region32
          $region31: #{discriminator_forward.4} parent=27 // pred_region
            // Predicated region
            $region33: #{discriminator_forward.4} parent=31 // pred_check
              _
            $region34: #{discriminator_forward.4} parent=31 // pred_check_branch
              %141 = sbr.rel (0) target = $region36
            $region35: #{discriminator_forward.4} parent=31 // pred_region
              loop: start=0, step=1, limit=1
              $region37: #{discriminator_forward.4} parent=35 // loop_pre_header
                _
              $region38: #{discriminator_forward.4} parent=35 // loop_header
                %s143 = sphi 0, %s147
                %p144 = scmp.ge.s32.totalorder %s143, 1
                %s148 = sphi %s137, %s137
                %s149 = sphi %s134, %s134
              $region39: #{discriminator_forward.4} parent=35 // loop_header_branch
                %146 = sbr.rel (%p144) target = $region43
              $region40: #{discriminator_forward.4} parent=35 // loop_body
                %v150 = vld [vmem:[%s148] sm:$0xff]
                %151 = vst [vmem:[%s149] sm:$0xff] %v150
                %v152 = vld [vmem:[%s148 + $0x8] sm:$0xff]
                %153 = vst [vmem:[%s149 + $0x8] sm:$0xff] %v152
                %v154 = vld [vmem:[%s148 + $0x40] sm:$0xff]
                %155 = vst [vmem:[%s149 + $0x10] sm:$0xff] %v154
                %v156 = vld [vmem:[%s148 + $0x48] sm:$0xff]
                %157 = vst [vmem:[%s149 + $0x18] sm:$0xff] %v156
                %v158 = vld [vmem:[%s148 + $0x80] sm:$0xff]
                %159 = vst [vmem:[%s149 + $0x20] sm:$0xff] %v158
                %v160 = vld [vmem:[%s148 + $0x88] sm:$0xff]
                %161 = vst [vmem:[%s149 + $0x28] sm:$0xff] %v160
                %v162 = vld [vmem:[%s148 + $0xc0] sm:$0xff]
                %163 = vst [vmem:[%s149 + $0x30] sm:$0xff] %v162
                %v164 = vld [vmem:[%s148 + $0xc8] sm:$0xff]
                %165 = vst [vmem:[%s149 + $0x38] sm:$0xff] %v164
                %v166 = vld [vmem:[%s148 + $0x100] sm:$0xff]
                %167 = vst [vmem:[%s149 + $0x40] sm:$0xff] %v166
                %v168 = vld [vmem:[%s148 + $0x108] sm:$0xff]
                %169 = vst [vmem:[%s149 + $0x48] sm:$0xff] %v168
                %v170 = vld [vmem:[%s148 + $0x140] sm:$0xff]
                %171 = vst [vmem:[%s149 + $0x50] sm:$0xff] %v170
                %v172 = vld [vmem:[%s148 + $0x148] sm:$0xff]
                %173 = vst [vmem:[%s149 + $0x58] sm:$0xff] %v172
                %v174 = vld [vmem:[%s148 + $0x180] sm:$0xff]
                %175 = vst [vmem:[%s149 + $0x60] sm:$0xff] %v174
                %v176 = vld [vmem:[%s148 + $0x188] sm:$0xff]
                %177 = vst [vmem:[%s149 + $0x68] sm:$0xff] %v176
                %v178 = vld [vmem:[%s148 + $0x1c0] sm:$0xff]
                %179 = vst [vmem:[%s149 + $0x70] sm:$0xff] %v178
                %v180 = vld [vmem:[%s148 + $0x1c8] sm:$0xff]
                %181 = vst [vmem:[%s149 + $0x78] sm:$0xff] %v180
                %v182 = vld [vmem:[%s148 + $0x200] sm:$0xff]
                %183 = vst [vmem:[%s149 + $0x80] sm:$0xff] %v182
                %v184 = vld [vmem:[%s148 + $0x208] sm:$0xff]
                %185 = vst [vmem:[%s149 + $0x88] sm:$0xff] %v184
                %v186 = vld [vmem:[%s148 + $0x240] sm:$0xff]
                %187 = vst [vmem:[%s149 + $0x90] sm:$0xff] %v186
                %v188 = vld [vmem:[%s148 + $0x248] sm:$0xff]
                %189 = vst [vmem:[%s149 + $0x98] sm:$0xff] %v188
                %v190 = vld [vmem:[%s148 + $0x280] sm:$0xff]
                %191 = vst [vmem:[%s149 + $0xa0] sm:$0xff] %v190
                %v192 = vld [vmem:[%s148 + $0x288] sm:$0xff]
                %193 = vst [vmem:[%s149 + $0xa8] sm:$0xff] %v192
                %v194 = vld [vmem:[%s148 + $0x2c0] sm:$0xff]
                %195 = vst [vmem:[%s149 + $0xb0] sm:$0xff] %v194
                %v196 = vld [vmem:[%s148 + $0x2c8] sm:$0xff]
                %197 = vst [vmem:[%s149 + $0xb8] sm:$0xff] %v196
                %v198 = vld [vmem:[%s148 + $0x300] sm:$0xff]
                %199 = vst [vmem:[%s149 + $0xc0] sm:$0xff] %v198
                %v200 = vld [vmem:[%s148 + $0x308] sm:$0xff]
                %201 = vst [vmem:[%s149 + $0xc8] sm:$0xff] %v200
                %v202 = vld [vmem:[%s148 + $0x340] sm:$0xff]
                %203 = vst [vmem:[%s149 + $0xd0] sm:$0xff] %v202
                %v204 = vld [vmem:[%s148 + $0x348] sm:$0xff]
                %205 = vst [vmem:[%s149 + $0xd8] sm:$0xff] %v204
                %v206 = vld [vmem:[%s148 + $0x380] sm:$0xff]
                %207 = vst [vmem:[%s149 + $0xe0] sm:$0xff] %v206
                %v208 = vld [vmem:[%s148 + $0x388] sm:$0xff]
                %209 = vst [vmem:[%s149 + $0xe8] sm:$0xff] %v208
                %v210 = vld [vmem:[%s148 + $0x3c0] sm:$0xff]
                %211 = vst [vmem:[%s149 + $0xf0] sm:$0xff] %v210
                %v212 = vld [vmem:[%s148 + $0x3c8] sm:$0xff]
                %213 = vst [vmem:[%s149 + $0xf8] sm:$0xff] %v212
              $region41: #{discriminator_forward.4} parent=35 // loop_footer
                %s147 = sadd.s32 1, %s143
              $region42: #{discriminator_forward.4} parent=35 // loop_footer_branch
                %142 = sbr.rel target = $region38
              $region43: #{discriminator_forward.4} parent=35 // loop_exit
                _
            $region36: #{discriminator_forward.4} parent=31 // pred_fallthru
              _
            // Predicated region
            $region44: #{discriminator_forward.4} parent=31 // pred_check
              _
            $region45: #{discriminator_forward.4} parent=31 // pred_check_branch
              %215 = sbr.rel target = $region47
            $region46: #{discriminator_forward.4} parent=31 // pred_region
              _
            $region47: #{discriminator_forward.4} parent=31 // pred_fallthru
              _
          $region32: #{discriminator_forward.4} parent=27 // pred_fallthru
            _
          %216 = vnop
        $region28: #{discriminator_forward.4} parent=23 // pred_fallthru
          _
      $region24: #{discriminator_forward.4} parent=5 // pred_fallthru
        _
      %p217 = scmp.le.s32.totalorder 1, %s9
      %p218 = scmp.lt.s32.totalorder %s9, 5
      %p219 = pnand %p217, %p218
      %p220 = pneg %p219
      // Predicated region
      $region48: #{discriminator_forward.4} parent=5 // pred_check
        _
      $region49: #{discriminator_forward.4} parent=5 // pred_check_branch
        %222 = sbr.rel (%p219) target = $region51
      $region50: #{discriminator_forward.4} parent=5 // pred_region
        %s223 = ssub.s32 %s9, 1
        %s224 = sand.u32 %s43, 1
        %s225 = sand.u32 %s43, 1
        %s226 = smul.addr %s225, 256
        %s227 = scalar_lea.vmem [#allocation2], %s226
        // Predicated region
        $region52: #{discriminator_forward.4} parent=50 // pred_check
          %p228 = pneg %p56
        $region53: #{discriminator_forward.4} parent=50 // pred_check_branch
          %230 = sbr.rel (%p228) target = $region55
        $region54: #{discriminator_forward.4} parent=50 // pred_region
          _
        $region55: #{discriminator_forward.4} parent=50 // pred_fallthru
          _
        %p231 = pneg %p30
        %p232 = pneg %p27
        %s233 = sand.u32 %s43, 1
        %s234 = sand.u32 %s43, 1
        %s235 = smul.addr %s234, 256
        %s236 = scalar_lea.vmem [#allocation2], %s235
        %p237 = pneg %p56
        %p238 = pneg %p53
        %p239 = pneg %p77
        %p240 = pneg %p74
        %p241 = pneg %p103
        %p242 = pneg %p100
        %s243 = smul.u32 4, %s14
        %p244 = scmp.lt.s32.totalorder %s243, 15
        %s245 = scalar_select %p244, %s243, 15
        %s246 = smul.addr %s245, 8
        %s247 = scalar_lea.vmem %s3, %s246
        %s248 = smul.u32 4, %s14
        %s249 = smul.u32 4, %s14
        %p250 = scmp.lt.s32.totalorder %s249, 15
        %s251 = scalar_select %p250, %s249, 15
        %s252 = smul.addr %s251, 8
        %s253 = scalar_lea.vmem %s3, %s252
        %s254 = smul.u32 4, %s14
        %v256 = vld [vmem:[%s0] sm:$0xf]
        %v257 = vld [vmem:[%s227] sm:$0xff]
        %v258 = vld [vmem:[%s227 + $0x8] sm:$0xff]
        %v259 = vld [vmem:[%s227 + $0x10] sm:$0xff]
        %v260 = vld [vmem:[%s227 + $0x18] sm:$0xff]
        %v261 = vld [vmem:[%s227 + $0x20] sm:$0xff]
        %v262 = vld [vmem:[%s227 + $0x28] sm:$0xff]
        %v263 = vld [vmem:[%s227 + $0x30] sm:$0xff]
        %v264 = vld [vmem:[%s227 + $0x38] sm:$0xff]
        %v265 = vld [vmem:[%s227 + $0x40] sm:$0xff]
        %v266 = vld [vmem:[%s227 + $0x48] sm:$0xff]
        %v267 = vld [vmem:[%s227 + $0x50] sm:$0xff]
        %v268 = vld [vmem:[%s227 + $0x58] sm:$0xff]
        %v269 = vld [vmem:[%s227 + $0x60] sm:$0xff]
        %v270 = vld [vmem:[%s227 + $0x68] sm:$0xff]
        %v271 = vld [vmem:[%s227 + $0x70] sm:$0xff]
        %v272 = vld [vmem:[%s227 + $0x78] sm:$0xff]
        %v273 = vld [vmem:[%s227 + $0x80] sm:$0xff]
        %v274 = vld [vmem:[%s227 + $0x88] sm:$0xff]
        %v275 = vld [vmem:[%s227 + $0x90] sm:$0xff]
        %v276 = vld [vmem:[%s227 + $0x98] sm:$0xff]
        %v277 = vld [vmem:[%s227 + $0xa0] sm:$0xff]
        %v278 = vld [vmem:[%s227 + $0xa8] sm:$0xff]
        %v279 = vld [vmem:[%s227 + $0xb0] sm:$0xff]
        %v280 = vld [vmem:[%s227 + $0xb8] sm:$0xff]
        %v281 = vld [vmem:[%s227 + $0xc0] sm:$0xff]
        %v282 = vld [vmem:[%s227 + $0xc8] sm:$0xff]
        %v283 = vld [vmem:[%s227 + $0xd0] sm:$0xff]
        %v284 = vld [vmem:[%s227 + $0xd8] sm:$0xff]
        %v285 = vld [vmem:[%s227 + $0xe0] sm:$0xff]
        %v286 = vld [vmem:[%s227 + $0xe8] sm:$0xff]
        %v287 = vld [vmem:[%s227 + $0xf0] sm:$0xff]
        %v288 = vld [vmem:[%s227 + $0xf8] sm:$0xff]
        %v289 = vld [vmem:[%s2] sm:$0xff]
        %291 = vset.pattern.permute.xlu0 0
        %292 = vperm.xlu0 %291, %v289
        %v293 = vpop.permute.xlu0 %292
        %v327 = vunpack.c.l.b16 %v257
        %v328 = vunpack.c.h.b16 %v257
        %v329 = vunpack.c.l.b16 %v258
        %v330 = vunpack.c.h.b16 %v258
        %v331 = vunpack.c.l.b16 %v259
        %v332 = vunpack.c.h.b16 %v259
        %v333 = vunpack.c.l.b16 %v260
        %v334 = vunpack.c.h.b16 %v260
        %v335 = vunpack.c.l.b16 %v261
        %v336 = vunpack.c.h.b16 %v261
        %v337 = vunpack.c.l.b16 %v262
        %v338 = vunpack.c.h.b16 %v262
        %v339 = vunpack.c.l.b16 %v263
        %v340 = vunpack.c.h.b16 %v263
        %v341 = vunpack.c.l.b16 %v264
        %v342 = vunpack.c.h.b16 %v264
        %v343 = vunpack.c.l.b16 %v265
        %v344 = vunpack.c.h.b16 %v265
        %v345 = vunpack.c.l.b16 %v266
        %v346 = vunpack.c.h.b16 %v266
        %v347 = vunpack.c.l.b16 %v267
        %v348 = vunpack.c.h.b16 %v267
        %v349 = vunpack.c.l.b16 %v268
        %v350 = vunpack.c.h.b16 %v268
        %v351 = vunpack.c.l.b16 %v269
        %v352 = vunpack.c.h.b16 %v269
        %v353 = vunpack.c.l.b16 %v270
        %v354 = vunpack.c.h.b16 %v270
        %v355 = vunpack.c.l.b16 %v271
        %v356 = vunpack.c.h.b16 %v271
        %v357 = vunpack.c.l.b16 %v272
        %v358 = vunpack.c.h.b16 %v272
        %v359 = vunpack.c.l.b16 %v273
        %v360 = vunpack.c.h.b16 %v273
        %v361 = vunpack.c.l.b16 %v274
        %v362 = vunpack.c.h.b16 %v274
        %v363 = vunpack.c.l.b16 %v275
        %v364 = vunpack.c.h.b16 %v275
        %v365 = vunpack.c.l.b16 %v276
        %v366 = vunpack.c.h.b16 %v276
        %v367 = vunpack.c.l.b16 %v277
        %v368 = vunpack.c.h.b16 %v277
        %v369 = vunpack.c.l.b16 %v278
        %v370 = vunpack.c.h.b16 %v278
        %v371 = vunpack.c.l.b16 %v279
        %v372 = vunpack.c.h.b16 %v279
        %v373 = vunpack.c.l.b16 %v280
        %v374 = vunpack.c.h.b16 %v280
        %v375 = vunpack.c.l.b16 %v281
        %v376 = vunpack.c.h.b16 %v281
        %v377 = vunpack.c.l.b16 %v282
        %v378 = vunpack.c.h.b16 %v282
        %v379 = vunpack.c.l.b16 %v283
        %v380 = vunpack.c.h.b16 %v283
        %v381 = vunpack.c.l.b16 %v284
        %v382 = vunpack.c.h.b16 %v284
        %v383 = vunpack.c.l.b16 %v285
        %v384 = vunpack.c.h.b16 %v285
        %v385 = vunpack.c.l.b16 %v286
        %v386 = vunpack.c.h.b16 %v286
        %v387 = vunpack.c.l.b16 %v287
        %v388 = vunpack.c.h.b16 %v287
        %v389 = vunpack.c.l.b16 %v288
        %v390 = vunpack.c.h.b16 %v288
        %v391 = vpack.c.b16 %v331, %v327
        %v392 = vpack.c.b16 %v332, %v328
        %v393 = vpack.c.b16 %v333, %v329
        %v394 = vpack.c.b16 %v334, %v330
        %v395 = vpack.c.b16 %v339, %v335
        %v396 = vpack.c.b16 %v340, %v336
        %v397 = vpack.c.b16 %v341, %v337
        %v398 = vpack.c.b16 %v342, %v338
        %v399 = vpack.c.b16 %v347, %v343
        %v400 = vpack.c.b16 %v348, %v344
        %v401 = vpack.c.b16 %v349, %v345
        %v402 = vpack.c.b16 %v350, %v346
        %v403 = vpack.c.b16 %v355, %v351
        %v404 = vpack.c.b16 %v356, %v352
        %v405 = vpack.c.b16 %v357, %v353
        %v406 = vpack.c.b16 %v358, %v354
        %v407 = vpack.c.b16 %v363, %v359
        %v408 = vpack.c.b16 %v364, %v360
        %v409 = vpack.c.b16 %v365, %v361
        %v410 = vpack.c.b16 %v366, %v362
        %v411 = vpack.c.b16 %v371, %v367
        %v412 = vpack.c.b16 %v372, %v368
        %v413 = vpack.c.b16 %v373, %v369
        %v414 = vpack.c.b16 %v374, %v370
        %v415 = vpack.c.b16 %v379, %v375
        %v416 = vpack.c.b16 %v380, %v376
        %v417 = vpack.c.b16 %v381, %v377
        %v418 = vpack.c.b16 %v382, %v378
        %v419 = vpack.c.b16 %v387, %v383
        %v420 = vpack.c.b16 %v388, %v384
        %v421 = vpack.c.b16 %v389, %v385
        %v422 = vpack.c.b16 %v390, %v386
        %455 = vmatprep.subr.bf16.mxu0 %v392
        %456 = vmatpush1.bf16.msra.mxu0 %v391
        %457 = vmatprep.subr.bf16.mxu0 %v396
        %458 = vmatpush1.bf16.msra.mxu0 %v395
        %459 = vmatprep.subr.bf16.mxu0 %v400
        %460 = vmatpush1.bf16.msra.mxu0 %v399
        %461 = vmatprep.subr.bf16.mxu0 %v404
        %462 = vmatpush1.bf16.msra.mxu0 %v403
        %463 = vmatprep.subr.bf16.mxu0 %v408
        %464 = vmatpush1.bf16.msra.mxu0 %v407
        %465 = vmatprep.subr.bf16.mxu0 %v412
        %466 = vmatpush1.bf16.msra.mxu0 %v411
        %467 = vmatprep.subr.bf16.mxu0 %v416
        %468 = vmatpush1.bf16.msra.mxu0 %v415
        %469 = vmatprep.subr.bf16.mxu0 %v420
        %470 = vmatpush1.bf16.msra.mxu0 %v419
        %471 = vmatprep.subr.bf16.mxu0 0
        %472 = vmatpush1.bf16.msra.mxu0 0
        %473 = vmatprep.subr.bf16.mxu0 0
        %474 = vmatpush1.bf16.msra.mxu0 0
        %475 = vmatprep.subr.bf16.mxu0 0
        %476 = vmatpush1.bf16.msra.mxu0 0
        %477 = vmatprep.subr.bf16.mxu0 0
        %478 = vmatpush1.bf16.msra.mxu0 0
        %479 = vmatprep.subr.bf16.mxu0 0
        %480 = vmatpush1.bf16.msra.mxu0 0
        %481 = vmatprep.subr.bf16.mxu0 0
        %482 = vmatpush1.bf16.msra.mxu0 0
        %483 = vmatprep.subr.bf16.mxu0 0
        %484 = vmatpush1.bf16.msra.mxu0 0
        %485 = vmatprep.subr.bf16.mxu0 0
        %486 = vmatpush1.bf16.msra.mxu0 0
        %487 = vmatprep.mubr.bf16.mxu0 0
        %488 = vmatmul.mubr.bf16.gmra.mrb[0].mxu0 %v256
        %v489 = vpop.f32.mrb[0].mxu0
        %v490 = vadd.f32 %v293, %v489
        %v491 = vpop.f32.mrb[0].mxu0
        %v492 = vadd.f32 %v293, %v491
        %v493 = vpop.f32.mrb[0].mxu0
        %v494 = vpop.f32.mrb[0].mxu0
        %495 = vdwg.mxu0
        %496 = vmatprep.subr.bf16.mxu0 %v394
        %497 = vmatpush1.bf16.msra.mxu0 %v393
        %498 = vmatprep.subr.bf16.mxu0 %v398
        %499 = vmatpush1.bf16.msra.mxu0 %v397
        %500 = vmatprep.subr.bf16.mxu0 %v402
        %501 = vmatpush1.bf16.msra.mxu0 %v401
        %502 = vmatprep.subr.bf16.mxu0 %v406
        %503 = vmatpush1.bf16.msra.mxu0 %v405
        %504 = vmatprep.subr.bf16.mxu0 %v410
        %505 = vmatpush1.bf16.msra.mxu0 %v409
        %506 = vmatprep.subr.bf16.mxu0 %v414
        %507 = vmatpush1.bf16.msra.mxu0 %v413
        %508 = vmatprep.subr.bf16.mxu0 %v418
        %509 = vmatpush1.bf16.msra.mxu0 %v417
        %510 = vmatprep.subr.bf16.mxu0 %v422
        %511 = vmatpush1.bf16.msra.mxu0 %v421
        %512 = vmatprep.subr.bf16.mxu0 0
        %513 = vmatpush1.bf16.msra.mxu0 0
        %514 = vmatprep.subr.bf16.mxu0 0
        %515 = vmatpush1.bf16.msra.mxu0 0
        %516 = vmatprep.subr.bf16.mxu0 0
        %517 = vmatpush1.bf16.msra.mxu0 0
        %518 = vmatprep.subr.bf16.mxu0 0
        %519 = vmatpush1.bf16.msra.mxu0 0
        %520 = vmatprep.subr.bf16.mxu0 0
        %521 = vmatpush1.bf16.msra.mxu0 0
        %522 = vmatprep.subr.bf16.mxu0 0
        %523 = vmatpush1.bf16.msra.mxu0 0
        %524 = vmatprep.subr.bf16.mxu0 0
        %525 = vmatpush1.bf16.msra.mxu0 0
        %526 = vmatprep.subr.bf16.mxu0 0
        %527 = vmatpush1.bf16.msra.mxu0 0
        %528 = vmatprep.mubr.bf16.mxu0 0
        %529 = vmatmul.mubr.bf16.gmra.mrb[0].mxu0 %v256
        %v530 = vpop.f32.mrb[0].mxu0
        %v531 = vadd.f32 %v293, %v530
        %v532 = vpop.f32.mrb[0].mxu0
        %v533 = vadd.f32 %v293, %v532
        %v534 = vpop.f32.mrb[0].mxu0
        %v535 = vpop.f32.mrb[0].mxu0
        %536 = vdwg.mxu0
        %vm537 = vcmp.ge.f32.partialorder %v490, 0.0
        %vm538 = vcmp.ge.f32.partialorder %v492, 0.0
        %vm539 = vcmp.ge.f32.partialorder %v531, 0.0
        %vm540 = vcmp.ge.f32.partialorder %v533, 0.0
        %v541 = vmul.f32 %v490, 0.01
        %v542 = vmul.f32 %v492, 0.01
        %v543 = vmul.f32 %v531, 0.01
        %v544 = vmul.f32 %v533, 0.01
        %v545 = vsel %vm537, %v490, %v541
        %v546 = vsel %vm538, %v492, %v542
        %v547 = vsel %vm539, %v531, %v543
        %v548 = vsel %vm540, %v533, %v544
        %549 = vst [vmem:[%s253] sm:$0xff] %v545
        %550 = vst [vmem:[%s253 + $0x8] sm:$0xff] %v546
        %551 = vst [vmem:[%s253 + $0x10] sm:$0xff] %v547
        %552 = vst [vmem:[%s253 + $0x18] sm:$0xff] %v548
        %s553 = smul.u32 4, %s14
        %p554 = scmp.lt.s32.totalorder %s553, 15
        %s555 = scalar_select %p554, %s553, 15
        %s556 = smul.addr %s555, 8
        %s557 = scalar_lea.vmem %s3, %s556
        // Predicated region
        $region56: #{discriminator_forward.4} parent=50 // pred_check
          %p558 = pneg %p100
        $region57: #{discriminator_forward.4} parent=50 // pred_check_branch
          %560 = sbr.rel (%p558) target = $region59
        $region58: #{discriminator_forward.4} parent=50 // pred_region
          %s561 = smul.u32 4, %s14
        $region59: #{discriminator_forward.4} parent=50 // pred_fallthru
          _
      $region51: #{discriminator_forward.4} parent=5 // pred_fallthru
        _
      %p562 = scmp.le.s32.totalorder 2, %s9
      // Predicated region
      $region60: #{discriminator_forward.4} parent=5 // pred_check
        %p563 = pneg %p562
      $region61: #{discriminator_forward.4} parent=5 // pred_check_branch
        %565 = sbr.rel (%p563) target = $region63
      $region62: #{discriminator_forward.4} parent=5 // pred_region
        %s566 = ssub.s32 %s9, 2
        // Predicated region
        $region64: #{discriminator_forward.4} parent=62 // pred_check
          %p567 = pneg %p106
        $region65: #{discriminator_forward.4} parent=62 // pred_check_branch
          %569 = sbr.rel (%p567) target = $region67
        $region66: #{discriminator_forward.4} parent=62 // pred_region
          %s570 = smul.u32 4, %s15
          %p571 = scmp.lt.s32.totalorder %s570, 15
          %s572 = scalar_select %p571, %s570, 15
          %s573 = smul.addr %s572, 8
          %s574 = scalar_lea.vmem %s3, %s573
        $region67: #{discriminator_forward.4} parent=62 // pred_fallthru
          _
      $region63: #{discriminator_forward.4} parent=5 // pred_fallthru
        _
    $region6: #{discriminator_forward.4} parent=1 // loop_footer
      %s13 = sadd.s32 1, %s9
    $region7: #{discriminator_forward.4} parent=1 // loop_footer_branch
      %8 = sbr.rel target = $region3
    $region8: #{discriminator_forward.4} parent=1 // loop_exit
      _

// kernel: discriminator_forward.5
$region0: #{discriminator_forward.5}
  #allocation0 [shape = 'u32[]', space=smem, size = 0x4, offset = 0x4, fixed_abs, tag = 'smem constant byte address 0x4 - core index']
  #allocation1 [shape = 'u32[144,128]{1,0:T(1,128)}', space=vmem, size = 0x12000, scoped, tag = 'internal scratch']
  %s0 = inlined_call_operand.vmem [shape: bf16[16,128], index: 0, kind: input, shape index: {}]
  %s1 = inlined_call_operand.vmem [shape: bf16[128,512], index: 1, kind: input, shape index: {}]
  %s2 = inlined_call_operand.vmem [shape: f32[16,1], index: 2, kind: input, shape index: {}]
  %s3 = inlined_call_operand.vmem [shape: f32[16,1], index: 3, kind: input, shape index: {}]
  %s4 = inlined_call_operand.vmem [shape: bf16[16,512], index: 4, kind: output, shape index: {}]
  %s5 = sld [smem:[#allocation0]]
  $region26: #{discriminator_forward.5} parent=0
    _
  %s7 = ssub.s32 1, %s5
  %s8 = scalar_select 0, %s7, %s5
  // Predicated region
  $region2: #{discriminator_forward.5} parent=0 // pred_check
    _
  $region3: #{discriminator_forward.5} parent=0 // pred_check_branch
    %10 = sbr.rel (0) target = $region5
  $region4: #{discriminator_forward.5} parent=0 // pred_region
    _
  $region5: #{discriminator_forward.5} parent=0 // pred_fallthru
    _
  // Predicated region
  $region6: #{discriminator_forward.5} parent=0 // pred_check
    _
  $region7: #{discriminator_forward.5} parent=0 // pred_check_branch
    %12 = sbr.rel (0) target = $region9
  $region8: #{discriminator_forward.5} parent=0 // pred_region
    _
  $region9: #{discriminator_forward.5} parent=0 // pred_fallthru
    _
  // Predicated region
  $region10: #{discriminator_forward.5} parent=0 // pred_check
    _
  $region11: #{discriminator_forward.5} parent=0 // pred_check_branch
    %14 = sbr.rel (0) target = $region13
  $region12: #{discriminator_forward.5} parent=0 // pred_region
    _
  $region13: #{discriminator_forward.5} parent=0 // pred_fallthru
    _
  // Predicated region
  $region14: #{discriminator_forward.5} parent=0 // pred_check
    _
  $region15: #{discriminator_forward.5} parent=0 // pred_check_branch
    %16 = sbr.rel (0) target = $region17
  $region16: #{discriminator_forward.5} parent=0 // pred_region
    _
  $region17: #{discriminator_forward.5} parent=0 // pred_fallthru
    _
  %v18 = vld [vmem:[%s0] sm:$0xf]
  %v19 = vld [vmem:[%s0 + $0x4] sm:$0xf]
  %v20 = vld [vmem:[%s1] sm:$0xff]
  %v21 = vld [vmem:[%s1 + $0x8] sm:$0xff]
  %v22 = vld [vmem:[%s1 + $0x10] sm:$0xff]
  %v23 = vld [vmem:[%s1 + $0x18] sm:$0xff]
  %v24 = vld [vmem:[%s1 + $0x20] sm:$0xff]
  %v25 = vld [vmem:[%s1 + $0x28] sm:$0xff]
  %v26 = vld [vmem:[%s1 + $0x30] sm:$0xff]
  %v27 = vld [vmem:[%s1 + $0x38] sm:$0xff]
  %v28 = vld [vmem:[%s1 + $0x40] sm:$0xff]
  %v29 = vld [vmem:[%s1 + $0x48] sm:$0xff]
  %v30 = vld [vmem:[%s1 + $0x50] sm:$0xff]
  %v31 = vld [vmem:[%s1 + $0x58] sm:$0xff]
  %v32 = vld [vmem:[%s1 + $0x60] sm:$0xff]
  %v33 = vld [vmem:[%s1 + $0x68] sm:$0xff]
  %v34 = vld [vmem:[%s1 + $0x70] sm:$0xff]
  %v35 = vld [vmem:[%s1 + $0x78] sm:$0xff]
  %v36 = vld [vmem:[%s1 + $0x80] sm:$0xff]
  %v37 = vld [vmem:[%s1 + $0x88] sm:$0xff]
  %v38 = vld [vmem:[%s1 + $0x90] sm:$0xff]
  %v39 = vld [vmem:[%s1 + $0x98] sm:$0xff]
  %v40 = vld [vmem:[%s1 + $0xa0] sm:$0xff]
  %v41 = vld [vmem:[%s1 + $0xa8] sm:$0xff]
  %v42 = vld [vmem:[%s1 + $0xb0] sm:$0xff]
  %v43 = vld [vmem:[%s1 + $0xb8] sm:$0xff]
  %v44 = vld [vmem:[%s1 + $0xc0] sm:$0xff]
  %v45 = vld [vmem:[%s1 + $0xc8] sm:$0xff]
  %v46 = vld [vmem:[%s1 + $0xd0] sm:$0xff]
  %v47 = vld [vmem:[%s1 + $0xd8] sm:$0xff]
  %v48 = vld [vmem:[%s1 + $0xe0] sm:$0xff]
  %v49 = vld [vmem:[%s1 + $0xe8] sm:$0xff]
  %v50 = vld [vmem:[%s1 + $0xf0] sm:$0xff]
  %v51 = vld [vmem:[%s1 + $0xf8] sm:$0xff]
  %v54 = vunpack.c.l.b16 %v18
  %v55 = vunpack.c.l.b16 %v19
  %v56 = vpack.c.b16 %v55, %v54
  %v90 = vunpack.c.l.b16 %v20
  %v91 = vunpack.c.h.b16 %v20
  %v92 = vunpack.c.l.b16 %v21
  %v93 = vunpack.c.h.b16 %v21
  %v94 = vunpack.c.l.b16 %v22
  %v95 = vunpack.c.h.b16 %v22
  %v96 = vunpack.c.l.b16 %v23
  %v97 = vunpack.c.h.b16 %v23
  %v98 = vunpack.c.l.b16 %v24
  %v99 = vunpack.c.h.b16 %v24
  %v100 = vunpack.c.l.b16 %v25
  %v101 = vunpack.c.h.b16 %v25
  %v102 = vunpack.c.l.b16 %v26
  %v103 = vunpack.c.h.b16 %v26
  %v104 = vunpack.c.l.b16 %v27
  %v105 = vunpack.c.h.b16 %v27
  %v106 = vunpack.c.l.b16 %v28
  %v107 = vunpack.c.h.b16 %v28
  %v108 = vunpack.c.l.b16 %v29
  %v109 = vunpack.c.h.b16 %v29
  %v110 = vunpack.c.l.b16 %v30
  %v111 = vunpack.c.h.b16 %v30
  %v112 = vunpack.c.l.b16 %v31
  %v113 = vunpack.c.h.b16 %v31
  %v114 = vunpack.c.l.b16 %v32
  %v115 = vunpack.c.h.b16 %v32
  %v116 = vunpack.c.l.b16 %v33
  %v117 = vunpack.c.h.b16 %v33
  %v118 = vunpack.c.l.b16 %v34
  %v119 = vunpack.c.h.b16 %v34
  %v120 = vunpack.c.l.b16 %v35
  %v121 = vunpack.c.h.b16 %v35
  %v122 = vunpack.c.l.b16 %v36
  %v123 = vunpack.c.h.b16 %v36
  %v124 = vunpack.c.l.b16 %v37
  %v125 = vunpack.c.h.b16 %v37
  %v126 = vunpack.c.l.b16 %v38
  %v127 = vunpack.c.h.b16 %v38
  %v128 = vunpack.c.l.b16 %v39
  %v129 = vunpack.c.h.b16 %v39
  %v130 = vunpack.c.l.b16 %v40
  %v131 = vunpack.c.h.b16 %v40
  %v132 = vunpack.c.l.b16 %v41
  %v133 = vunpack.c.h.b16 %v41
  %v134 = vunpack.c.l.b16 %v42
  %v135 = vunpack.c.h.b16 %v42
  %v136 = vunpack.c.l.b16 %v43
  %v137 = vunpack.c.h.b16 %v43
  %v138 = vunpack.c.l.b16 %v44
  %v139 = vunpack.c.h.b16 %v44
  %v140 = vunpack.c.l.b16 %v45
  %v141 = vunpack.c.h.b16 %v45
  %v142 = vunpack.c.l.b16 %v46
  %v143 = vunpack.c.h.b16 %v46
  %v144 = vunpack.c.l.b16 %v47
  %v145 = vunpack.c.h.b16 %v47
  %v146 = vunpack.c.l.b16 %v48
  %v147 = vunpack.c.h.b16 %v48
  %v148 = vunpack.c.l.b16 %v49
  %v149 = vunpack.c.h.b16 %v49
  %v150 = vunpack.c.l.b16 %v50
  %v151 = vunpack.c.h.b16 %v50
  %v152 = vunpack.c.l.b16 %v51
  %v153 = vunpack.c.h.b16 %v51
  %v154 = vpack.c.b16 %v94, %v90
  %v155 = vpack.c.b16 %v95, %v91
  %v156 = vpack.c.b16 %v96, %v92
  %v157 = vpack.c.b16 %v97, %v93
  %v158 = vpack.c.b16 %v102, %v98
  %v159 = vpack.c.b16 %v103, %v99
  %v160 = vpack.c.b16 %v104, %v100
  %v161 = vpack.c.b16 %v105, %v101
  %v162 = vpack.c.b16 %v110, %v106
  %v163 = vpack.c.b16 %v111, %v107
  %v164 = vpack.c.b16 %v112, %v108
  %v165 = vpack.c.b16 %v113, %v109
  %v166 = vpack.c.b16 %v118, %v114
  %v167 = vpack.c.b16 %v119, %v115
  %v168 = vpack.c.b16 %v120, %v116
  %v169 = vpack.c.b16 %v121, %v117
  %v170 = vpack.c.b16 %v126, %v122
  %v171 = vpack.c.b16 %v127, %v123
  %v172 = vpack.c.b16 %v128, %v124
  %v173 = vpack.c.b16 %v129, %v125
  %v174 = vpack.c.b16 %v134, %v130
  %v175 = vpack.c.b16 %v135, %v131
  %v176 = vpack.c.b16 %v136, %v132
  %v177 = vpack.c.b16 %v137, %v133
  %v178 = vpack.c.b16 %v142, %v138
  %v179 = vpack.c.b16 %v143, %v139
  %v180 = vpack.c.b16 %v144, %v140
  %v181 = vpack.c.b16 %v145, %v141
  %v182 = vpack.c.b16 %v150, %v146
  %v183 = vpack.c.b16 %v151, %v147
  %v184 = vpack.c.b16 %v152, %v148
  %v185 = vpack.c.b16 %v153, %v149
  %218 = vmatprep.subr.bf16.mxu0 %v155
  %219 = vmatpush1.bf16.msra.mxu0 %v154
  %220 = vmatprep.subr.bf16.mxu0 %v159
  %221 = vmatpush1.bf16.msra.mxu0 %v158
  %222 = vmatprep.subr.bf16.mxu0 %v163
  %223 = vmatpush1.bf16.msra.mxu0 %v162
  %224 = vmatprep.subr.bf16.mxu0 %v167
  %225 = vmatpush1.bf16.msra.mxu0 %v166
  %226 = vmatprep.subr.bf16.mxu0 %v171
  %227 = vmatpush1.bf16.msra.mxu0 %v170
  %228 = vmatprep.subr.bf16.mxu0 %v175
  %229 = vmatpush1.bf16.msra.mxu0 %v174
  %230 = vmatprep.subr.bf16.mxu0 %v179
  %231 = vmatpush1.bf16.msra.mxu0 %v178
  %232 = vmatprep.subr.bf16.mxu0 %v183
  %233 = vmatpush1.bf16.msra.mxu0 %v182
  %234 = vmatprep.subr.bf16.mxu0 0
  %235 = vmatpush1.bf16.msra.mxu0 0
  %236 = vmatprep.subr.bf16.mxu0 0
  %237 = vmatpush1.bf16.msra.mxu0 0
  %238 = vmatprep.subr.bf16.mxu0 0
  %239 = vmatpush1.bf16.msra.mxu0 0
  %240 = vmatprep.subr.bf16.mxu0 0
  %241 = vmatpush1.bf16.msra.mxu0 0
  %242 = vmatprep.subr.bf16.mxu0 0
  %243 = vmatpush1.bf16.msra.mxu0 0
  %244 = vmatprep.subr.bf16.mxu0 0
  %245 = vmatpush1.bf16.msra.mxu0 0
  %246 = vmatprep.subr.bf16.mxu0 0
  %247 = vmatpush1.bf16.msra.mxu0 0
  %248 = vmatprep.subr.bf16.mxu0 0
  %249 = vmatpush1.bf16.msra.mxu0 0
  %250 = vmatprep.mubr.bf16.mxu0 0
  %251 = vmatmul.mubr.bf16.gmra.mrb[0].mxu0 %v56
  %v252 = vpop.f32.mrb[0].mxu0
  %v253 = vadd.f32 0.0, %v252
  %v254 = vpop.f32.mrb[0].mxu0
  %v255 = vadd.f32 0.0, %v254
  %v256 = vpop.f32.mrb[0].mxu0
  %v257 = vadd.f32 0.0, %v256
  %v258 = vpop.f32.mrb[0].mxu0
  %v259 = vadd.f32 0.0, %v258
  %260 = vdwg.mxu0
  %261 = vmatprep.subr.bf16.mxu0 %v157
  %262 = vmatpush1.bf16.msra.mxu0 %v156
  %263 = vmatprep.subr.bf16.mxu0 %v161
  %264 = vmatpush1.bf16.msra.mxu0 %v160
  %265 = vmatprep.subr.bf16.mxu0 %v165
  %266 = vmatpush1.bf16.msra.mxu0 %v164
  %267 = vmatprep.subr.bf16.mxu0 %v169
  %268 = vmatpush1.bf16.msra.mxu0 %v168
  %269 = vmatprep.subr.bf16.mxu0 %v173
  %270 = vmatpush1.bf16.msra.mxu0 %v172
  %271 = vmatprep.subr.bf16.mxu0 %v177
  %272 = vmatpush1.bf16.msra.mxu0 %v176
  %273 = vmatprep.subr.bf16.mxu0 %v181
  %274 = vmatpush1.bf16.msra.mxu0 %v180
  %275 = vmatprep.subr.bf16.mxu0 %v185
  %276 = vmatpush1.bf16.msra.mxu0 %v184
  %277 = vmatprep.subr.bf16.mxu0 0
  %278 = vmatpush1.bf16.msra.mxu0 0
  %279 = vmatprep.subr.bf16.mxu0 0
  %280 = vmatpush1.bf16.msra.mxu0 0
  %281 = vmatprep.subr.bf16.mxu0 0
  %282 = vmatpush1.bf16.msra.mxu0 0
  %283 = vmatprep.subr.bf16.mxu0 0
  %284 = vmatpush1.bf16.msra.mxu0 0
  %285 = vmatprep.subr.bf16.mxu0 0
  %286 = vmatpush1.bf16.msra.mxu0 0
  %287 = vmatprep.subr.bf16.mxu0 0
  %288 = vmatpush1.bf16.msra.mxu0 0
  %289 = vmatprep.subr.bf16.mxu0 0
  %290 = vmatpush1.bf16.msra.mxu0 0
  %291 = vmatprep.subr.bf16.mxu0 0
  %292 = vmatpush1.bf16.msra.mxu0 0
  %293 = vmatprep.mubr.bf16.mxu0 0
  %294 = vmatmul.mubr.bf16.gmra.mrb[0].mxu0 %v56
  %v295 = vpop.f32.mrb[0].mxu0
  %v296 = vadd.f32 0.0, %v295
  %v297 = vpop.f32.mrb[0].mxu0
  %v298 = vadd.f32 0.0, %v297
  %v299 = vpop.f32.mrb[0].mxu0
  %v300 = vadd.f32 0.0, %v299
  %v301 = vpop.f32.mrb[0].mxu0
  %v302 = vadd.f32 0.0, %v301
  %303 = vdwg.mxu0
  %v304 = vadd.f32 %v253, %v255
  %v305 = vadd.f32 %v304, %v296
  %v306 = vadd.f32 %v305, %v298
  %307 = vadd.xlane.f32.xlu0 %v306
  %v308 = vpop.xlane.xlu0 %307
  %v309 = vadd.f32 %v257, %v259
  %v310 = vadd.f32 %v309, %v300
  %v311 = vadd.f32 %v310, %v302
  %312 = vadd.xlane.f32.xlu0 %v311
  %v313 = vpop.xlane.xlu0 %312
  %v314 = vrcp.pop 512.0
  %v315 = vmul.f32 %v308, %v314
  %v316 = vmul.f32 %v313, %v314
  %v317 = vsub.f32 %v253, %v315
  %v318 = vsub.f32 %v255, %v315
  %v319 = vsub.f32 %v296, %v315
  %v320 = vsub.f32 %v298, %v315
  %v321 = vsub.f32 %v257, %v316
  %v322 = vsub.f32 %v259, %v316
  %v323 = vsub.f32 %v300, %v316
  %v324 = vsub.f32 %v302, %v316
  %v325 = vmul.f32 %v317, %v317
  %v326 = vmul.f32 %v318, %v318
  %v327 = vmul.f32 %v319, %v319
  %v328 = vmul.f32 %v320, %v320
  %v329 = vmul.f32 %v321, %v321
  %v330 = vmul.f32 %v322, %v322
  %v331 = vmul.f32 %v323, %v323
  %v332 = vmul.f32 %v324, %v324
  %v333 = vadd.f32 %v325, %v326
  %v334 = vadd.f32 %v333, %v327
  %v335 = vadd.f32 %v334, %v328
  %336 = vadd.xlane.f32.xlu0 %v335
  %v337 = vpop.xlane.xlu0 %336
  %v338 = vadd.f32 %v329, %v330
  %v339 = vadd.f32 %v338, %v331
  %v340 = vadd.f32 %v339, %v332
  %341 = vadd.xlane.f32.xlu0 %v340
  %v342 = vpop.xlane.xlu0 %341
  %v343 = vmul.f32 %v337, %v314
  %v344 = vmul.f32 %v342, %v314
  %v345 = vadd.f32 %v343, 1e-05
  %v346 = vadd.f32 %v344, 1e-05
  %v347 = vrsqrt.pop %v345
  %v348 = vrsqrt.pop %v346
  %v349 = vmul.f32 %v317, %v347
  %v350 = vmul.f32 %v318, %v347
  %v351 = vmul.f32 %v319, %v347
  %v352 = vmul.f32 %v320, %v347
  %v353 = vmul.f32 %v321, %v348
  %v354 = vmul.f32 %v322, %v348
  %v355 = vmul.f32 %v323, %v348
  %v356 = vmul.f32 %v324, %v348
  %v357 = vld [vmem:[%s2] sm:$0xff]
  %v358 = vld [vmem:[%s2 + $0x8] sm:$0xff]
  %360 = vset.pattern.permute.xlu0 0
  %361 = vperm.xlu0 %360, %v357
  %v362 = vpop.permute.xlu0 %361
  %365 = vset.pattern.permute.xlu0 0
  %366 = vperm.xlu0 %365, %v358
  %v367 = vpop.permute.xlu0 %366
  %v369 = vmul.f32 %v349, %v362
  %v370 = vmul.f32 %v350, %v362
  %v371 = vmul.f32 %v351, %v362
  %v372 = vmul.f32 %v352, %v362
  %v373 = vmul.f32 %v353, %v367
  %v374 = vmul.f32 %v354, %v367
  %v375 = vmul.f32 %v355, %v367
  %v376 = vmul.f32 %v356, %v367
  %v377 = vld [vmem:[%s3] sm:$0xff]
  %v378 = vld [vmem:[%s3 + $0x8] sm:$0xff]
  %380 = vset.pattern.permute.xlu0 0
  %381 = vperm.xlu0 %380, %v377
  %v382 = vpop.permute.xlu0 %381
  %385 = vset.pattern.permute.xlu0 0
  %386 = vperm.xlu0 %385, %v378
  %v387 = vpop.permute.xlu0 %386
  %v389 = vadd.f32 %v369, %v382
  %v390 = vadd.f32 %v370, %v382
  %v391 = vadd.f32 %v371, %v382
  %v392 = vadd.f32 %v372, %v382
  %v393 = vadd.f32 %v373, %v387
  %v394 = vadd.f32 %v374, %v387
  %v395 = vadd.f32 %v375, %v387
  %v396 = vadd.f32 %v376, %v387
  %vm397 = vcmp.ge.f32.partialorder %v389, 0.0
  %vm398 = vcmp.ge.f32.partialorder %v390, 0.0
  %vm399 = vcmp.ge.f32.partialorder %v391, 0.0
  %vm400 = vcmp.ge.f32.partialorder %v392, 0.0
  %vm401 = vcmp.ge.f32.partialorder %v393, 0.0
  %vm402 = vcmp.ge.f32.partialorder %v394, 0.0
  %vm403 = vcmp.ge.f32.partialorder %v395, 0.0
  %vm404 = vcmp.ge.f32.partialorder %v396, 0.0
  %v405 = vmul.f32 %v389, 0.01
  %v406 = vmul.f32 %v390, 0.01
  %v407 = vmul.f32 %v391, 0.01
  %v408 = vmul.f32 %v392, 0.01
  %v409 = vmul.f32 %v393, 0.01
  %v410 = vmul.f32 %v394, 0.01
  %v411 = vmul.f32 %v395, 0.01
  %v412 = vmul.f32 %v396, 0.01
  %v413 = vsel %vm397, %v389, %v405
  %v414 = vsel %vm398, %v390, %v406
  %v415 = vsel %vm399, %v391, %v407
  %v416 = vsel %vm400, %v392, %v408
  %v417 = vsel %vm401, %v393, %v409
  %v418 = vsel %vm402, %v394, %v410
  %v419 = vsel %vm403, %v395, %v411
  %v420 = vsel %vm404, %v396, %v412
  %v421 = vpack.c.bf16 %v417, %v413
  %v422 = vpack.c.bf16 %v418, %v414
  %v423 = vpack.c.bf16 %v419, %v415
  %v424 = vpack.c.bf16 %v420, %v416
  %v429 = vunpack.c.l.b16 %v421
  %v430 = vunpack.c.l.b16 %v422
  %v431 = vunpack.c.l.b16 %v423
  %v432 = vunpack.c.l.b16 %v424
  %v433 = vunpack.c.h.b16 %v421
  %v434 = vunpack.c.h.b16 %v422
  %v435 = vunpack.c.h.b16 %v423
  %v436 = vunpack.c.h.b16 %v424
  %v437 = vpack.c.b16 %v430, %v429
  %v438 = vpack.c.b16 %v432, %v431
  %v439 = vpack.c.b16 %v434, %v433
  %v440 = vpack.c.b16 %v436, %v435
  %445 = vst [vmem:[%s4] sm:$0xff] %v437
  %446 = vst [vmem:[%s4 + $0x8] sm:$0xff] %v438
  %447 = vst [vmem:[%s4 + $0x10] sm:$0xff] %v439
  %448 = vst [vmem:[%s4 + $0x18] sm:$0xff] %v440
  // Predicated region
  $region18: #{discriminator_forward.5} parent=0 // pred_check
    _
  $region19: #{discriminator_forward.5} parent=0 // pred_check_branch
    %450 = sbr.rel (0) target = $region21
  $region20: #{discriminator_forward.5} parent=0 // pred_region
    _
  $region21: #{discriminator_forward.5} parent=0 // pred_fallthru
    _
  // Predicated region
  $region22: #{discriminator_forward.5} parent=0 // pred_check
    _
  $region23: #{discriminator_forward.5} parent=0 // pred_check_branch
    %452 = sbr.rel (0) target = $region25
  $region24: #{discriminator_forward.5} parent=0 // pred_region
    _
  $region25: #{discriminator_forward.5} parent=0 // pred_fallthru
    _

// kernel: discriminator_forward.6
$region0: #{discriminator_forward.6}
  #allocation0 [shape = 'u32[]', space=smem, size = 0x4, offset = 0x4, fixed_abs, tag = 'smem constant byte address 0x4 - core index']
  #allocation1 [shape = 'u32[144,128]{1,0:T(1,128)}', space=vmem, size = 0x12000, scoped, tag = 'internal scratch']
  %s0 = inlined_call_operand.vmem [shape: bf16[32,256], index: 0, kind: input, shape index: {}]
  %s1 = inlined_call_operand.vmem [shape: bf16[256,128], index: 1, kind: input, shape index: {}]
  %s2 = inlined_call_operand.vmem [shape: f32[32,1], index: 2, kind: input, shape index: {}]
  %s3 = inlined_call_operand.vmem [shape: f32[32,1], index: 3, kind: input, shape index: {}]
  %s4 = inlined_call_operand.vmem [shape: bf16[32,128], index: 4, kind: output, shape index: {}]
  %s5 = sld [smem:[#allocation0]]
  $region26: #{discriminator_forward.6} parent=0
    _
  %s7 = ssub.s32 1, %s5
  %s8 = scalar_select 0, %s7, %s5
  // Predicated region
  $region2: #{discriminator_forward.6} parent=0 // pred_check
    _
  $region3: #{discriminator_forward.6} parent=0 // pred_check_branch
    %10 = sbr.rel (0) target = $region5
  $region4: #{discriminator_forward.6} parent=0 // pred_region
    _
  $region5: #{discriminator_forward.6} parent=0 // pred_fallthru
    _
  // Predicated region
  $region6: #{discriminator_forward.6} parent=0 // pred_check
    _
  $region7: #{discriminator_forward.6} parent=0 // pred_check_branch
    %12 = sbr.rel (0) target = $region9
  $region8: #{discriminator_forward.6} parent=0 // pred_region
    _
  $region9: #{discriminator_forward.6} parent=0 // pred_fallthru
    _
  // Predicated region
  $region10: #{discriminator_forward.6} parent=0 // pred_check
    _
  $region11: #{discriminator_forward.6} parent=0 // pred_check_branch
    %14 = sbr.rel (0) target = $region13
  $region12: #{discriminator_forward.6} parent=0 // pred_region
    _
  $region13: #{discriminator_forward.6} parent=0 // pred_fallthru
    _
  // Predicated region
  $region14: #{discriminator_forward.6} parent=0 // pred_check
    _
  $region15: #{discriminator_forward.6} parent=0 // pred_check_branch
    %16 = sbr.rel (0) target = $region17
  $region16: #{discriminator_forward.6} parent=0 // pred_region
    _
  $region17: #{discriminator_forward.6} parent=0 // pred_fallthru
    _
  %v18 = vld [vmem:[%s0] sm:$0xff]
  %v19 = vld [vmem:[%s0 + $0x8] sm:$0xff]
  %v20 = vld [vmem:[%s0 + $0x10] sm:$0xff]
  %v21 = vld [vmem:[%s0 + $0x18] sm:$0xff]
  %v22 = vld [vmem:[%s1] sm:$0xf]
  %v23 = vld [vmem:[%s1 + $0x4] sm:$0xf]
  %v24 = vld [vmem:[%s1 + $0x8] sm:$0xf]
  %v25 = vld [vmem:[%s1 + $0xc] sm:$0xf]
  %v26 = vld [vmem:[%s1 + $0x10] sm:$0xf]
  %v27 = vld [vmem:[%s1 + $0x14] sm:$0xf]
  %v28 = vld [vmem:[%s1 + $0x18] sm:$0xf]
  %v29 = vld [vmem:[%s1 + $0x1c] sm:$0xf]
  %v30 = vld [vmem:[%s1 + $0x20] sm:$0xf]
  %v31 = vld [vmem:[%s1 + $0x24] sm:$0xf]
  %v32 = vld [vmem:[%s1 + $0x28] sm:$0xf]
  %v33 = vld [vmem:[%s1 + $0x2c] sm:$0xf]
  %v34 = vld [vmem:[%s1 + $0x30] sm:$0xf]
  %v35 = vld [vmem:[%s1 + $0x34] sm:$0xf]
  %v36 = vld [vmem:[%s1 + $0x38] sm:$0xf]
  %v37 = vld [vmem:[%s1 + $0x3c] sm:$0xf]
  %v38 = vld [vmem:[%s1 + $0x40] sm:$0xf]
  %v39 = vld [vmem:[%s1 + $0x44] sm:$0xf]
  %v40 = vld [vmem:[%s1 + $0x48] sm:$0xf]
  %v41 = vld [vmem:[%s1 + $0x4c] sm:$0xf]
  %v42 = vld [vmem:[%s1 + $0x50] sm:$0xf]
  %v43 = vld [vmem:[%s1 + $0x54] sm:$0xf]
  %v44 = vld [vmem:[%s1 + $0x58] sm:$0xf]
  %v45 = vld [vmem:[%s1 + $0x5c] sm:$0xf]
  %v46 = vld [vmem:[%s1 + $0x60] sm:$0xf]
  %v47 = vld [vmem:[%s1 + $0x64] sm:$0xf]
  %v48 = vld [vmem:[%s1 + $0x68] sm:$0xf]
  %v49 = vld [vmem:[%s1 + $0x6c] sm:$0xf]
  %v50 = vld [vmem:[%s1 + $0x70] sm:$0xf]
  %v51 = vld [vmem:[%s1 + $0x74] sm:$0xf]
  %v52 = vld [vmem:[%s1 + $0x78] sm:$0xf]
  %v53 = vld [vmem:[%s1 + $0x7c] sm:$0xf]
  %v58 = vunpack.c.l.b16 %v18
  %v59 = vunpack.c.h.b16 %v18
  %v60 = vunpack.c.l.b16 %v19
  %v61 = vunpack.c.h.b16 %v19
  %v62 = vunpack.c.l.b16 %v20
  %v63 = vunpack.c.h.b16 %v20
  %v64 = vunpack.c.l.b16 %v21
  %v65 = vunpack.c.h.b16 %v21
  %v66 = vpack.c.b16 %v60, %v58
  %v67 = vpack.c.b16 %v61, %v59
  %v68 = vpack.c.b16 %v64, %v62
  %v69 = vpack.c.b16 %v65, %v63
  %v106 = vunpack.c.l.b16 %v22
  %v107 = vunpack.c.l.b16 %v23
  %v108 = vunpack.c.l.b16 %v24
  %v109 = vunpack.c.l.b16 %v25
  %v110 = vunpack.c.l.b16 %v26
  %v111 = vunpack.c.l.b16 %v27
  %v112 = vunpack.c.l.b16 %v28
  %v113 = vunpack.c.l.b16 %v29
  %v114 = vunpack.c.l.b16 %v30
  %v115 = vunpack.c.l.b16 %v31
  %v116 = vunpack.c.l.b16 %v32
  %v117 = vunpack.c.l.b16 %v33
  %v118 = vunpack.c.l.b16 %v34
  %v119 = vunpack.c.l.b16 %v35
  %v120 = vunpack.c.l.b16 %v36
  %v121 = vunpack.c.l.b16 %v37
  %v122 = vunpack.c.l.b16 %v38
  %v123 = vunpack.c.l.b16 %v39
  %v124 = vunpack.c.l.b16 %v40
  %v125 = vunpack.c.l.b16 %v41
  %v126 = vunpack.c.l.b16 %v42
  %v127 = vunpack.c.l.b16 %v43
  %v128 = vunpack.c.l.b16 %v44
  %v129 = vunpack.c.l.b16 %v45
  %v130 = vunpack.c.l.b16 %v46
  %v131 = vunpack.c.l.b16 %v47
  %v132 = vunpack.c.l.b16 %v48
  %v133 = vunpack.c.l.b16 %v49
  %v134 = vunpack.c.l.b16 %v50
  %v135 = vunpack.c.l.b16 %v51
  %v136 = vunpack.c.l.b16 %v52
  %v137 = vunpack.c.l.b16 %v53
  %v138 = vpack.c.b16 %v107, %v106
  %v139 = vpack.c.b16 %v109, %v108
  %v140 = vpack.c.b16 %v111, %v110
  %v141 = vpack.c.b16 %v113, %v112
  %v142 = vpack.c.b16 %v115, %v114
  %v143 = vpack.c.b16 %v117, %v116
  %v144 = vpack.c.b16 %v119, %v118
  %v145 = vpack.c.b16 %v121, %v120
  %v146 = vpack.c.b16 %v123, %v122
  %v147 = vpack.c.b16 %v125, %v124
  %v148 = vpack.c.b16 %v127, %v126
  %v149 = vpack.c.b16 %v129, %v128
  %v150 = vpack.c.b16 %v131, %v130
  %v151 = vpack.c.b16 %v133, %v132
  %v152 = vpack.c.b16 %v135, %v134
  %v153 = vpack.c.b16 %v137, %v136
  %170 = vmatprep.subr.bf16.mxu0 0
  %171 = vmatpush1.bf16.msra.mxu0 %v138
  %172 = vmatprep.subr.bf16.mxu0 0
  %173 = vmatpush1.bf16.msra.mxu0 %v139
  %174 = vmatprep.subr.bf16.mxu0 0
  %175 = vmatpush1.bf16.msra.mxu0 %v140
  %176 = vmatprep.subr.bf16.mxu0 0
  %177 = vmatpush1.bf16.msra.mxu0 %v141
  %178 = vmatprep.subr.bf16.mxu0 0
  %179 = vmatpush1.bf16.msra.mxu0 %v142
  %180 = vmatprep.subr.bf16.mxu0 0
  %181 = vmatpush1.bf16.msra.mxu0 %v143
  %182 = vmatprep.subr.bf16.mxu0 0
  %183 = vmatpush1.bf16.msra.mxu0 %v144
  %184 = vmatprep.subr.bf16.mxu0 0
  %185 = vmatpush1.bf16.msra.mxu0 %v145
  %186 = vmatprep.subr.bf16.mxu0 0
  %187 = vmatpush1.bf16.msra.mxu0 %v146
  %188 = vmatprep.subr.bf16.mxu0 0
  %189 = vmatpush1.bf16.msra.mxu0 %v147
  %190 = vmatprep.subr.bf16.mxu0 0
  %191 = vmatpush1.bf16.msra.mxu0 %v148
  %192 = vmatprep.subr.bf16.mxu0 0
  %193 = vmatpush1.bf16.msra.mxu0 %v149
  %194 = vmatprep.subr.bf16.mxu0 0
  %195 = vmatpush1.bf16.msra.mxu0 %v150
  %196 = vmatprep.subr.bf16.mxu0 0
  %197 = vmatpush1.bf16.msra.mxu0 %v151
  %198 = vmatprep.subr.bf16.mxu0 0
  %199 = vmatpush1.bf16.msra.mxu0 %v152
  %200 = vmatprep.subr.bf16.mxu0 0
  %201 = vmatpush1.bf16.msra.mxu0 %v153
  %202 = vmatprep.mubr.bf16.mxu0 %v67
  %203 = vmatmul.mubr.bf16.gmra.mrb[0].mxu0 %v66
  %v204 = vpop.f32.mrb[0].mxu0
  %v205 = vadd.f32 0.0, %v204
  %v206 = vpop.f32.mrb[0].mxu0
  %v207 = vpop.f32.mrb[0].mxu0
  %v208 = vadd.f32 0.0, %v207
  %v209 = vpop.f32.mrb[0].mxu0
  %210 = vmatprep.mubr.bf16.mxu0 %v69
  %211 = vmatmul.mubr.bf16.gmra.mrb[0].mxu0 %v68
  %v212 = vpop.f32.mrb[0].mxu0
  %v213 = vadd.f32 0.0, %v212
  %v214 = vpop.f32.mrb[0].mxu0
  %v215 = vpop.f32.mrb[0].mxu0
  %v216 = vadd.f32 0.0, %v215
  %v217 = vpop.f32.mrb[0].mxu0
  %218 = vdwg.mxu0
  %219 = vadd.xlane.f32.xlu0 %v205
  %v220 = vpop.xlane.xlu0 %219
  %221 = vadd.xlane.f32.xlu0 %v208
  %v222 = vpop.xlane.xlu0 %221
  %223 = vadd.xlane.f32.xlu0 %v213
  %v224 = vpop.xlane.xlu0 %223
  %225 = vadd.xlane.f32.xlu0 %v216
  %v226 = vpop.xlane.xlu0 %225
  %v227 = vrcp.pop 128.0
  %v228 = vmul.f32 %v220, %v227
  %v229 = vmul.f32 %v222, %v227
  %v230 = vmul.f32 %v224, %v227
  %v231 = vmul.f32 %v226, %v227
  %v232 = vsub.f32 %v205, %v228
  %v233 = vsub.f32 %v208, %v229
  %v234 = vsub.f32 %v213, %v230
  %v235 = vsub.f32 %v216, %v231
  %v236 = vmul.f32 %v232, %v232
  %v237 = vmul.f32 %v233, %v233
  %v238 = vmul.f32 %v234, %v234
  %v239 = vmul.f32 %v235, %v235
  %240 = vadd.xlane.f32.xlu0 %v236
  %v241 = vpop.xlane.xlu0 %240
  %242 = vadd.xlane.f32.xlu0 %v237
  %v243 = vpop.xlane.xlu0 %242
  %244 = vadd.xlane.f32.xlu0 %v238
  %v245 = vpop.xlane.xlu0 %244
  %246 = vadd.xlane.f32.xlu0 %v239
  %v247 = vpop.xlane.xlu0 %246
  %v248 = vmul.f32 %v241, %v227
  %v249 = vmul.f32 %v243, %v227
  %v250 = vmul.f32 %v245, %v227
  %v251 = vmul.f32 %v247, %v227
  %v252 = vadd.f32 %v248, 1e-05
  %v253 = vadd.f32 %v249, 1e-05
  %v254 = vadd.f32 %v250, 1e-05
  %v255 = vadd.f32 %v251, 1e-05
  %v256 = vrsqrt.pop %v252
  %v257 = vrsqrt.pop %v253
  %v258 = vrsqrt.pop %v254
  %v259 = vrsqrt.pop %v255
  %v260 = vmul.f32 %v232, %v256
  %v261 = vmul.f32 %v233, %v257
  %v262 = vmul.f32 %v234, %v258
  %v263 = vmul.f32 %v235, %v259
  %v264 = vld [vmem:[%s2] sm:$0xff]
  %v265 = vld [vmem:[%s2 + $0x8] sm:$0xff]
  %v266 = vld [vmem:[%s2 + $0x10] sm:$0xff]
  %v267 = vld [vmem:[%s2 + $0x18] sm:$0xff]
  %269 = vset.pattern.permute.xlu0 0
  %270 = vperm.xlu0 %269, %v264
  %v271 = vpop.permute.xlu0 %270
  %274 = vset.pattern.permute.xlu0 0
  %275 = vperm.xlu0 %274, %v265
  %v276 = vpop.permute.xlu0 %275
  %279 = vset.pattern.permute.xlu0 0
  %280 = vperm.xlu0 %279, %v266
  %v281 = vpop.permute.xlu0 %280
  %284 = vset.pattern.permute.xlu0 0
  %285 = vperm.xlu0 %284, %v267
  %v286 = vpop.permute.xlu0 %285
  %v288 = vmul.f32 %v260, %v271
  %v289 = vmul.f32 %v261, %v276
  %v290 = vmul.f32 %v262, %v281
  %v291 = vmul.f32 %v263, %v286
  %v292 = vld [vmem:[%s3] sm:$0xff]
  %v293 = vld [vmem:[%s3 + $0x8] sm:$0xff]
  %v294 = vld [vmem:[%s3 + $0x10] sm:$0xff]
  %v295 = vld [vmem:[%s3 + $0x18] sm:$0xff]
  %297 = vset.pattern.permute.xlu0 0
  %298 = vperm.xlu0 %297, %v292
  %v299 = vpop.permute.xlu0 %298
  %302 = vset.pattern.permute.xlu0 0
  %303 = vperm.xlu0 %302, %v293
  %v304 = vpop.permute.xlu0 %303
  %307 = vset.pattern.permute.xlu0 0
  %308 = vperm.xlu0 %307, %v294
  %v309 = vpop.permute.xlu0 %308
  %312 = vset.pattern.permute.xlu0 0
  %313 = vperm.xlu0 %312, %v295
  %v314 = vpop.permute.xlu0 %313
  %v316 = vadd.f32 %v288, %v299
  %v317 = vadd.f32 %v289, %v304
  %v318 = vadd.f32 %v290, %v309
  %v319 = vadd.f32 %v291, %v314
  %vm320 = vcmp.ge.f32.partialorder %v316, 0.0
  %vm321 = vcmp.ge.f32.partialorder %v317, 0.0
  %vm322 = vcmp.ge.f32.partialorder %v318, 0.0
  %vm323 = vcmp.ge.f32.partialorder %v319, 0.0
  %v324 = vmul.f32 %v316, 0.01
  %v325 = vmul.f32 %v317, 0.01
  %v326 = vmul.f32 %v318, 0.01
  %v327 = vmul.f32 %v319, 0.01
  %v328 = vsel %vm320, %v316, %v324
  %v329 = vsel %vm321, %v317, %v325
  %v330 = vsel %vm322, %v318, %v326
  %v331 = vsel %vm323, %v319, %v327
  %v332 = vpack.c.bf16 %v329, %v328
  %v333 = vpack.c.bf16 %v331, %v330
  %v336 = vunpack.c.l.b16 %v332
  %v337 = vunpack.c.h.b16 %v332
  %v338 = vunpack.c.l.b16 %v333
  %v339 = vunpack.c.h.b16 %v333
  %v340 = vpack.c.b16 %v336, %v336
  %v341 = vpack.c.b16 %v337, %v337
  %v342 = vpack.c.b16 %v338, %v338
  %v343 = vpack.c.b16 %v339, %v339
  %348 = vst [vmem:[%s4] sm:$0xf] %v340
  %349 = vst [vmem:[%s4 + $0x4] sm:$0xf] %v341
  %350 = vst [vmem:[%s4 + $0x8] sm:$0xf] %v342
  %351 = vst [vmem:[%s4 + $0xc] sm:$0xf] %v343
  // Predicated region
  $region18: #{discriminator_forward.6} parent=0 // pred_check
    _
  $region19: #{discriminator_forward.6} parent=0 // pred_check_branch
    %353 = sbr.rel (0) target = $region21
  $region20: #{discriminator_forward.6} parent=0 // pred_region
    _
  $region21: #{discriminator_forward.6} parent=0 // pred_fallthru
    _
  // Predicated region
  $region22: #{discriminator_forward.6} parent=0 // pred_check
    _
  $region23: #{discriminator_forward.6} parent=0 // pred_check_branch
    %355 = sbr.rel (0) target = $region25
  $region24: #{discriminator_forward.6} parent=0 // pred_region
    _
  $region25: #{discriminator_forward.6} parent=0 // pred_fallthru
    _

// kernel: discriminator_forward.7
$region0: #{discriminator_forward.7}
  #allocation0 [shape = 'u32[]', space=smem, size = 0x4, offset = 0x4, fixed_abs, tag = 'smem constant byte address 0x4 - core index']
  #allocation1 [shape = 'u32[144,128]{1,0:T(1,128)}', space=vmem, size = 0x12000, scoped, tag = 'internal scratch']
  %s0 = inlined_call_operand.vmem [shape: bf16[64,512], index: 0, kind: input, shape index: {}]
  %s1 = inlined_call_operand.vmem [shape: bf16[512,32], index: 1, kind: input, shape index: {}]
  %s2 = inlined_call_operand.vmem [shape: f32[64,1], index: 2, kind: input, shape index: {}]
  %s3 = inlined_call_operand.vmem [shape: f32[64,1], index: 3, kind: input, shape index: {}]
  %s4 = inlined_call_operand.vmem [shape: f32[64,32], index: 4, kind: input, shape index: {}]
  %s5 = inlined_call_operand.vmem [shape: f32[32,2], index: 5, kind: input, shape index: {}]
  %s6 = inlined_call_operand.hbm [shape: f32[1,2], index: 6, kind: output, shape index: {}]
  %s7 = sld [smem:[#allocation0]]
  $region34: #{discriminator_forward.7} parent=0
    _
  %s9 = ssub.s32 1, %s7
  %s10 = scalar_select 0, %s9, %s7
  $region1: #{discriminator_forward.7} parent=0
    #allocation2 [shape = 'u8[512]{0}', space=vmem, size = 0x400, scoped, tag = 'output window, operand 0, single buffered']
    #allocation3 [shape = 's32[1]{0}', space=sflag, size = 0x4, scoped, tag = 'scoped memory for discriminator_forward.7']
    %11 = vsyncpa [#allocation3], 0
    // Predicated region
    $region2: #{discriminator_forward.7} parent=1 // pred_check
      _
    $region3: #{discriminator_forward.7} parent=1 // pred_check_branch
      %13 = sbr.rel (0) target = $region5
    $region4: #{discriminator_forward.7} parent=1 // pred_region
      _
    $region5: #{discriminator_forward.7} parent=1 // pred_fallthru
      _
    // Predicated region
    $region6: #{discriminator_forward.7} parent=1 // pred_check
      _
    $region7: #{discriminator_forward.7} parent=1 // pred_check_branch
      %15 = sbr.rel (0) target = $region9
    $region8: #{discriminator_forward.7} parent=1 // pred_region
      _
    $region9: #{discriminator_forward.7} parent=1 // pred_fallthru
      _
    // Predicated region
    $region10: #{discriminator_forward.7} parent=1 // pred_check
      _
    $region11: #{discriminator_forward.7} parent=1 // pred_check_branch
      %17 = sbr.rel (0) target = $region13
    $region12: #{discriminator_forward.7} parent=1 // pred_region
      _
    $region13: #{discriminator_forward.7} parent=1 // pred_fallthru
      _
    // Predicated region
    $region14: #{discriminator_forward.7} parent=1 // pred_check
      _
    $region15: #{discriminator_forward.7} parent=1 // pred_check_branch
      %19 = sbr.rel (0) target = $region17
    $region16: #{discriminator_forward.7} parent=1 // pred_region
      _
    $region17: #{discriminator_forward.7} parent=1 // pred_fallthru
      _
    // Predicated region
    $region18: #{discriminator_forward.7} parent=1 // pred_check
      _
    $region19: #{discriminator_forward.7} parent=1 // pred_check_branch
      %21 = sbr.rel (0) target = $region21
    $region20: #{discriminator_forward.7} parent=1 // pred_region
      _
    $region21: #{discriminator_forward.7} parent=1 // pred_fallthru
      _
    // Predicated region
    $region22: #{discriminator_forward.7} parent=1 // pred_check
      _
    $region23: #{discriminator_forward.7} parent=1 // pred_check_branch
      %23 = sbr.rel (0) target = $region25
    $region24: #{discriminator_forward.7} parent=1 // pred_region
      _
    $region25: #{discriminator_forward.7} parent=1 // pred_fallthru
      _
    %v25 = vld [vmem:[%s0] sm:$0xff]
    %v26 = vld [vmem:[%s0 + $0x8] sm:$0xff]
    %v27 = vld [vmem:[%s0 + $0x10] sm:$0xff]
    %v28 = vld [vmem:[%s0 + $0x18] sm:$0xff]
    %v29 = vld [vmem:[%s0 + $0x20] sm:$0xff]
    %v30 = vld [vmem:[%s0 + $0x28] sm:$0xff]
    %v31 = vld [vmem:[%s0 + $0x30] sm:$0xff]
    %v32 = vld [vmem:[%s0 + $0x38] sm:$0xff]
    %v33 = vld [vmem:[%s0 + $0x40] sm:$0xff]
    %v34 = vld [vmem:[%s0 + $0x48] sm:$0xff]
    %v35 = vld [vmem:[%s0 + $0x50] sm:$0xff]
    %v36 = vld [vmem:[%s0 + $0x58] sm:$0xff]
    %v37 = vld [vmem:[%s0 + $0x60] sm:$0xff]
    %v38 = vld [vmem:[%s0 + $0x68] sm:$0xff]
    %v39 = vld [vmem:[%s0 + $0x70] sm:$0xff]
    %v40 = vld [vmem:[%s0 + $0x78] sm:$0xff]
    %v41 = vld [vmem:[%s1] sm:$0xf]
    %v42 = vld [vmem:[%s1 + $0x4] sm:$0xf]
    %v43 = vld [vmem:[%s1 + $0x8] sm:$0xf]
    %v44 = vld [vmem:[%s1 + $0xc] sm:$0xf]
    %v45 = vld [vmem:[%s1 + $0x10] sm:$0xf]
    %v46 = vld [vmem:[%s1 + $0x14] sm:$0xf]
    %v47 = vld [vmem:[%s1 + $0x18] sm:$0xf]
    %v48 = vld [vmem:[%s1 + $0x1c] sm:$0xf]
    %v49 = vld [vmem:[%s1 + $0x20] sm:$0xf]
    %v50 = vld [vmem:[%s1 + $0x24] sm:$0xf]
    %v51 = vld [vmem:[%s1 + $0x28] sm:$0xf]
    %v52 = vld [vmem:[%s1 + $0x2c] sm:$0xf]
    %v53 = vld [vmem:[%s1 + $0x30] sm:$0xf]
    %v54 = vld [vmem:[%s1 + $0x34] sm:$0xf]
    %v55 = vld [vmem:[%s1 + $0x38] sm:$0xf]
    %v56 = vld [vmem:[%s1 + $0x3c] sm:$0xf]
    %v57 = vld [vmem:[%s1 + $0x40] sm:$0xf]
    %v58 = vld [vmem:[%s1 + $0x44] sm:$0xf]
    %v59 = vld [vmem:[%s1 + $0x48] sm:$0xf]
    %v60 = vld [vmem:[%s1 + $0x4c] sm:$0xf]
    %v61 = vld [vmem:[%s1 + $0x50] sm:$0xf]
    %v62 = vld [vmem:[%s1 + $0x54] sm:$0xf]
    %v63 = vld [vmem:[%s1 + $0x58] sm:$0xf]
    %v64 = vld [vmem:[%s1 + $0x5c] sm:$0xf]
    %v65 = vld [vmem:[%s1 + $0x60] sm:$0xf]
    %v66 = vld [vmem:[%s1 + $0x64] sm:$0xf]
    %v67 = vld [vmem:[%s1 + $0x68] sm:$0xf]
    %v68 = vld [vmem:[%s1 + $0x6c] sm:$0xf]
    %v69 = vld [vmem:[%s1 + $0x70] sm:$0xf]
    %v70 = vld [vmem:[%s1 + $0x74] sm:$0xf]
    %v71 = vld [vmem:[%s1 + $0x78] sm:$0xf]
    %v72 = vld [vmem:[%s1 + $0x7c] sm:$0xf]
    %v73 = vld [vmem:[%s1 + $0x80] sm:$0xf]
    %v74 = vld [vmem:[%s1 + $0x84] sm:$0xf]
    %v75 = vld [vmem:[%s1 + $0x88] sm:$0xf]
    %v76 = vld [vmem:[%s1 + $0x8c] sm:$0xf]
    %v77 = vld [vmem:[%s1 + $0x90] sm:$0xf]
    %v78 = vld [vmem:[%s1 + $0x94] sm:$0xf]
    %v79 = vld [vmem:[%s1 + $0x98] sm:$0xf]
    %v80 = vld [vmem:[%s1 + $0x9c] sm:$0xf]
    %v81 = vld [vmem:[%s1 + $0xa0] sm:$0xf]
    %v82 = vld [vmem:[%s1 + $0xa4] sm:$0xf]
    %v83 = vld [vmem:[%s1 + $0xa8] sm:$0xf]
    %v84 = vld [vmem:[%s1 + $0xac] sm:$0xf]
    %v85 = vld [vmem:[%s1 + $0xb0] sm:$0xf]
    %v86 = vld [vmem:[%s1 + $0xb4] sm:$0xf]
    %v87 = vld [vmem:[%s1 + $0xb8] sm:$0xf]
    %v88 = vld [vmem:[%s1 + $0xbc] sm:$0xf]
    %v89 = vld [vmem:[%s1 + $0xc0] sm:$0xf]
    %v90 = vld [vmem:[%s1 + $0xc4] sm:$0xf]
    %v91 = vld [vmem:[%s1 + $0xc8] sm:$0xf]
    %v92 = vld [vmem:[%s1 + $0xcc] sm:$0xf]
    %v93 = vld [vmem:[%s1 + $0xd0] sm:$0xf]
    %v94 = vld [vmem:[%s1 + $0xd4] sm:$0xf]
    %v95 = vld [vmem:[%s1 + $0xd8] sm:$0xf]
    %v96 = vld [vmem:[%s1 + $0xdc] sm:$0xf]
    %v97 = vld [vmem:[%s1 + $0xe0] sm:$0xf]
    %v98 = vld [vmem:[%s1 + $0xe4] sm:$0xf]
    %v99 = vld [vmem:[%s1 + $0xe8] sm:$0xf]
    %v100 = vld [vmem:[%s1 + $0xec] sm:$0xf]
    %v101 = vld [vmem:[%s1 + $0xf0] sm:$0xf]
    %v102 = vld [vmem:[%s1 + $0xf4] sm:$0xf]
    %v103 = vld [vmem:[%s1 + $0xf8] sm:$0xf]
    %v104 = vld [vmem:[%s1 + $0xfc] sm:$0xf]
    %v121 = vunpack.c.l.b16 %v25
    %v122 = vunpack.c.h.b16 %v25
    %v123 = vunpack.c.l.b16 %v26
    %v124 = vunpack.c.h.b16 %v26
    %v125 = vunpack.c.l.b16 %v27
    %v126 = vunpack.c.h.b16 %v27
    %v127 = vunpack.c.l.b16 %v28
    %v128 = vunpack.c.h.b16 %v28
    %v129 = vunpack.c.l.b16 %v29
    %v130 = vunpack.c.h.b16 %v29
    %v131 = vunpack.c.l.b16 %v30
    %v132 = vunpack.c.h.b16 %v30
    %v133 = vunpack.c.l.b16 %v31
    %v134 = vunpack.c.h.b16 %v31
    %v135 = vunpack.c.l.b16 %v32
    %v136 = vunpack.c.h.b16 %v32
    %v137 = vunpack.c.l.b16 %v33
    %v138 = vunpack.c.h.b16 %v33
    %v139 = vunpack.c.l.b16 %v34
    %v140 = vunpack.c.h.b16 %v34
    %v141 = vunpack.c.l.b16 %v35
    %v142 = vunpack.c.h.b16 %v35
    %v143 = vunpack.c.l.b16 %v36
    %v144 = vunpack.c.h.b16 %v36
    %v145 = vunpack.c.l.b16 %v37
    %v146 = vunpack.c.h.b16 %v37
    %v147 = vunpack.c.l.b16 %v38
    %v148 = vunpack.c.h.b16 %v38
    %v149 = vunpack.c.l.b16 %v39
    %v150 = vunpack.c.h.b16 %v39
    %v151 = vunpack.c.l.b16 %v40
    %v152 = vunpack.c.h.b16 %v40
    %v153 = vpack.c.b16 %v125, %v121
    %v154 = vpack.c.b16 %v126, %v122
    %v155 = vpack.c.b16 %v127, %v123
    %v156 = vpack.c.b16 %v128, %v124
    %v157 = vpack.c.b16 %v133, %v129
    %v158 = vpack.c.b16 %v134, %v130
    %v159 = vpack.c.b16 %v135, %v131
    %v160 = vpack.c.b16 %v136, %v132
    %v161 = vpack.c.b16 %v141, %v137
    %v162 = vpack.c.b16 %v142, %v138
    %v163 = vpack.c.b16 %v143, %v139
    %v164 = vpack.c.b16 %v144, %v140
    %v165 = vpack.c.b16 %v149, %v145
    %v166 = vpack.c.b16 %v150, %v146
    %v167 = vpack.c.b16 %v151, %v147
    %v168 = vpack.c.b16 %v152, %v148
    %v249 = vunpack.c.l.b16 %v41
    %v250 = vunpack.c.l.b16 %v42
    %v251 = vunpack.c.l.b16 %v43
    %v252 = vunpack.c.l.b16 %v44
    %v253 = vunpack.c.l.b16 %v45
    %v254 = vunpack.c.l.b16 %v46
    %v255 = vunpack.c.l.b16 %v47
    %v256 = vunpack.c.l.b16 %v48
    %v257 = vunpack.c.l.b16 %v49
    %v258 = vunpack.c.l.b16 %v50
    %v259 = vunpack.c.l.b16 %v51
    %v260 = vunpack.c.l.b16 %v52
    %v261 = vunpack.c.l.b16 %v53
    %v262 = vunpack.c.l.b16 %v54
    %v263 = vunpack.c.l.b16 %v55
    %v264 = vunpack.c.l.b16 %v56
    %v265 = vunpack.c.l.b16 %v57
    %v266 = vunpack.c.l.b16 %v58
    %v267 = vunpack.c.l.b16 %v59
    %v268 = vunpack.c.l.b16 %v60
    %v269 = vunpack.c.l.b16 %v61
    %v270 = vunpack.c.l.b16 %v62
    %v271 = vunpack.c.l.b16 %v63
    %v272 = vunpack.c.l.b16 %v64
    %v273 = vunpack.c.l.b16 %v65
    %v274 = vunpack.c.l.b16 %v66
    %v275 = vunpack.c.l.b16 %v67
    %v276 = vunpack.c.l.b16 %v68
    %v277 = vunpack.c.l.b16 %v69
    %v278 = vunpack.c.l.b16 %v70
    %v279 = vunpack.c.l.b16 %v71
    %v280 = vunpack.c.l.b16 %v72
    %v281 = vunpack.c.l.b16 %v73
    %v282 = vunpack.c.l.b16 %v74
    %v283 = vunpack.c.l.b16 %v75
    %v284 = vunpack.c.l.b16 %v76
    %v285 = vunpack.c.l.b16 %v77
    %v286 = vunpack.c.l.b16 %v78
    %v287 = vunpack.c.l.b16 %v79
    %v288 = vunpack.c.l.b16 %v80
    %v289 = vunpack.c.l.b16 %v81
    %v290 = vunpack.c.l.b16 %v82
    %v291 = vunpack.c.l.b16 %v83
    %v292 = vunpack.c.l.b16 %v84
    %v293 = vunpack.c.l.b16 %v85
    %v294 = vunpack.c.l.b16 %v86
    %v295 = vunpack.c.l.b16 %v87
    %v296 = vunpack.c.l.b16 %v88
    %v297 = vunpack.c.l.b16 %v89
    %v298 = vunpack.c.l.b16 %v90
    %v299 = vunpack.c.l.b16 %v91
    %v300 = vunpack.c.l.b16 %v92
    %v301 = vunpack.c.l.b16 %v93
    %v302 = vunpack.c.l.b16 %v94
    %v303 = vunpack.c.l.b16 %v95
    %v304 = vunpack.c.l.b16 %v96
    %v305 = vunpack.c.l.b16 %v97
    %v306 = vunpack.c.l.b16 %v98
    %v307 = vunpack.c.l.b16 %v99
    %v308 = vunpack.c.l.b16 %v100
    %v309 = vunpack.c.l.b16 %v101
    %v310 = vunpack.c.l.b16 %v102
    %v311 = vunpack.c.l.b16 %v103
    %v312 = vunpack.c.l.b16 %v104
    %v313 = vpack.c.b16 %v250, %v249
    %v314 = vpack.c.b16 %v252, %v251
    %v315 = vpack.c.b16 %v254, %v253
    %v316 = vpack.c.b16 %v256, %v255
    %v317 = vpack.c.b16 %v258, %v257
    %v318 = vpack.c.b16 %v260, %v259
    %v319 = vpack.c.b16 %v262, %v261
    %v320 = vpack.c.b16 %v264, %v263
    %v321 = vpack.c.b16 %v266, %v265
    %v322 = vpack.c.b16 %v268, %v267
    %v323 = vpack.c.b16 %v270, %v269
    %v324 = vpack.c.b16 %v272, %v271
    %v325 = vpack.c.b16 %v274, %v273
    %v326 = vpack.c.b16 %v276, %v275
    %v327 = vpack.c.b16 %v278, %v277
    %v328 = vpack.c.b16 %v280, %v279
    %v329 = vpack.c.b16 %v282, %v281
    %v330 = vpack.c.b16 %v284, %v283
    %v331 = vpack.c.b16 %v286, %v285
    %v332 = vpack.c.b16 %v288, %v287
    %v333 = vpack.c.b16 %v290, %v289
    %v334 = vpack.c.b16 %v292, %v291
    %v335 = vpack.c.b16 %v294, %v293
    %v336 = vpack.c.b16 %v296, %v295
    %v337 = vpack.c.b16 %v298, %v297
    %v338 = vpack.c.b16 %v300, %v299
    %v339 = vpack.c.b16 %v302, %v301
    %v340 = vpack.c.b16 %v304, %v303
    %v341 = vpack.c.b16 %v306, %v305
    %v342 = vpack.c.b16 %v308, %v307
    %v343 = vpack.c.b16 %v310, %v309
    %v344 = vpack.c.b16 %v312, %v311
    %377 = vmatprep.subr.bf16.mxu0 0
    %378 = vmatpush1.bf16.msra.mxu0 %v313
    %379 = vmatprep.subr.bf16.mxu0 0
    %380 = vmatpush1.bf16.msra.mxu0 %v314
    %381 = vmatprep.subr.bf16.mxu0 0
    %382 = vmatpush1.bf16.msra.mxu0 %v315
    %383 = vmatprep.subr.bf16.mxu0 0
    %384 = vmatpush1.bf16.msra.mxu0 %v316
    %385 = vmatprep.subr.bf16.mxu0 0
    %386 = vmatpush1.bf16.msra.mxu0 %v317
    %387 = vmatprep.subr.bf16.mxu0 0
    %388 = vmatpush1.bf16.msra.mxu0 %v318
    %389 = vmatprep.subr.bf16.mxu0 0
    %390 = vmatpush1.bf16.msra.mxu0 %v319
    %391 = vmatprep.subr.bf16.mxu0 0
    %392 = vmatpush1.bf16.msra.mxu0 %v320
    %393 = vmatprep.subr.bf16.mxu0 0
    %394 = vmatpush1.bf16.msra.mxu0 %v321
    %395 = vmatprep.subr.bf16.mxu0 0
    %396 = vmatpush1.bf16.msra.mxu0 %v322
    %397 = vmatprep.subr.bf16.mxu0 0
    %398 = vmatpush1.bf16.msra.mxu0 %v323
    %399 = vmatprep.subr.bf16.mxu0 0
    %400 = vmatpush1.bf16.msra.mxu0 %v324
    %401 = vmatprep.subr.bf16.mxu0 0
    %402 = vmatpush1.bf16.msra.mxu0 %v325
    %403 = vmatprep.subr.bf16.mxu0 0
    %404 = vmatpush1.bf16.msra.mxu0 %v326
    %405 = vmatprep.subr.bf16.mxu0 0
    %406 = vmatpush1.bf16.msra.mxu0 %v327
    %407 = vmatprep.subr.bf16.mxu0 0
    %408 = vmatpush1.bf16.msra.mxu0 %v328
    %409 = vmatprep.mubr.bf16.mxu0 %v154
    %410 = vmatmul.mubr.bf16.gmra.mrb[0].mxu0 %v153
    %v411 = vpop.f32.mrb[0].mxu0
    %v412 = vadd.f32 0.0, %v411
    %v413 = vpop.f32.mrb[0].mxu0
    %v414 = vpop.f32.mrb[0].mxu0
    %v415 = vadd.f32 0.0, %v414
    %v416 = vpop.f32.mrb[0].mxu0
    %417 = vmatprep.mubr.bf16.mxu0 %v158
    %418 = vmatmul.mubr.bf16.gmra.mrb[0].mxu0 %v157
    %v419 = vpop.f32.mrb[0].mxu0
    %v420 = vadd.f32 0.0, %v419
    %v421 = vpop.f32.mrb[0].mxu0
    %v422 = vpop.f32.mrb[0].mxu0
    %v423 = vadd.f32 0.0, %v422
    %v424 = vpop.f32.mrb[0].mxu0
    %425 = vmatprep.mubr.bf16.mxu0 %v162
    %426 = vmatmul.mubr.bf16.gmra.mrb[0].mxu0 %v161
    %v427 = vpop.f32.mrb[0].mxu0
    %v428 = vadd.f32 0.0, %v427
    %v429 = vpop.f32.mrb[0].mxu0
    %v430 = vpop.f32.mrb[0].mxu0
    %v431 = vadd.f32 0.0, %v430
    %v432 = vpop.f32.mrb[0].mxu0
    %433 = vmatprep.mubr.bf16.mxu0 %v166
    %434 = vmatmul.mubr.bf16.gmra.mrb[0].mxu0 %v165
    %v435 = vpop.f32.mrb[0].mxu0
    %v436 = vadd.f32 0.0, %v435
    %v437 = vpop.f32.mrb[0].mxu0
    %v438 = vpop.f32.mrb[0].mxu0
    %v439 = vadd.f32 0.0, %v438
    %v440 = vpop.f32.mrb[0].mxu0
    %441 = vdwg.mxu0
    %442 = vmatprep.subr.bf16.mxu0 0
    %443 = vmatpush1.bf16.msra.mxu0 %v329
    %444 = vmatprep.subr.bf16.mxu0 0
    %445 = vmatpush1.bf16.msra.mxu0 %v330
    %446 = vmatprep.subr.bf16.mxu0 0
    %447 = vmatpush1.bf16.msra.mxu0 %v331
    %448 = vmatprep.subr.bf16.mxu0 0
    %449 = vmatpush1.bf16.msra.mxu0 %v332
    %450 = vmatprep.subr.bf16.mxu0 0
    %451 = vmatpush1.bf16.msra.mxu0 %v333
    %452 = vmatprep.subr.bf16.mxu0 0
    %453 = vmatpush1.bf16.msra.mxu0 %v334
    %454 = vmatprep.subr.bf16.mxu0 0
    %455 = vmatpush1.bf16.msra.mxu0 %v335
    %456 = vmatprep.subr.bf16.mxu0 0
    %457 = vmatpush1.bf16.msra.mxu0 %v336
    %458 = vmatprep.subr.bf16.mxu0 0
    %459 = vmatpush1.bf16.msra.mxu0 %v337
    %460 = vmatprep.subr.bf16.mxu0 0
    %461 = vmatpush1.bf16.msra.mxu0 %v338
    %462 = vmatprep.subr.bf16.mxu0 0
    %463 = vmatpush1.bf16.msra.mxu0 %v339
    %464 = vmatprep.subr.bf16.mxu0 0
    %465 = vmatpush1.bf16.msra.mxu0 %v340
    %466 = vmatprep.subr.bf16.mxu0 0
    %467 = vmatpush1.bf16.msra.mxu0 %v341
    %468 = vmatprep.subr.bf16.mxu0 0
    %469 = vmatpush1.bf16.msra.mxu0 %v342
    %470 = vmatprep.subr.bf16.mxu0 0
    %471 = vmatpush1.bf16.msra.mxu0 %v343
    %472 = vmatprep.subr.bf16.mxu0 0
    %473 = vmatpush1.bf16.msra.mxu0 %v344
    %474 = vmatprep.mubr.bf16.mxu0 %v156
    %475 = vmatmul.mubr.bf16.gmra.mrb[0].mxu0 %v155
    %v476 = vpop.f32.mrb[0].mxu0
    %v477 = vadd.f32 %v412, %v476
    %v478 = vpop.f32.mrb[0].mxu0
    %v479 = vpop.f32.mrb[0].mxu0
    %v480 = vadd.f32 %v415, %v479
    %v481 = vpop.f32.mrb[0].mxu0
    %482 = vmatprep.mubr.bf16.mxu0 %v160
    %483 = vmatmul.mubr.bf16.gmra.mrb[0].mxu0 %v159
    %v484 = vpop.f32.mrb[0].mxu0
    %v485 = vadd.f32 %v420, %v484
    %v486 = vpop.f32.mrb[0].mxu0
    %v487 = vpop.f32.mrb[0].mxu0
    %v488 = vadd.f32 %v423, %v487
    %v489 = vpop.f32.mrb[0].mxu0
    %490 = vmatprep.mubr.bf16.mxu0 %v164
    %491 = vmatmul.mubr.bf16.gmra.mrb[0].mxu0 %v163
    %v492 = vpop.f32.mrb[0].mxu0
    %v493 = vadd.f32 %v428, %v492
    %v494 = vpop.f32.mrb[0].mxu0
    %v495 = vpop.f32.mrb[0].mxu0
    %v496 = vadd.f32 %v431, %v495
    %v497 = vpop.f32.mrb[0].mxu0
    %498 = vmatprep.mubr.bf16.mxu0 %v168
    %499 = vmatmul.mubr.bf16.gmra.mrb[0].mxu0 %v167
    %v500 = vpop.f32.mrb[0].mxu0
    %v501 = vadd.f32 %v436, %v500
    %v502 = vpop.f32.mrb[0].mxu0
    %v503 = vpop.f32.mrb[0].mxu0
    %v504 = vadd.f32 %v439, %v503
    %v505 = vpop.f32.mrb[0].mxu0
    %506 = vdwg.mxu0
    %vm507 = vcmask 261120
    %v508 = vsel %vm507, %v477, 0.0
    %509 = vadd.xlane.f32.xlu0 %v508
    %v510 = vpop.xlane.xlu0 %509
    %v511 = vsel %vm507, %v480, 0.0
    %512 = vadd.xlane.f32.xlu0 %v511
    %v513 = vpop.xlane.xlu0 %512
    %v514 = vsel %vm507, %v485, 0.0
    %515 = vadd.xlane.f32.xlu0 %v514
    %v516 = vpop.xlane.xlu0 %515
    %v517 = vsel %vm507, %v488, 0.0
    %518 = vadd.xlane.f32.xlu0 %v517
    %v519 = vpop.xlane.xlu0 %518
    %v520 = vsel %vm507, %v493, 0.0
    %521 = vadd.xlane.f32.xlu0 %v520
    %v522 = vpop.xlane.xlu0 %521
    %v523 = vsel %vm507, %v496, 0.0
    %524 = vadd.xlane.f32.xlu0 %v523
    %v525 = vpop.xlane.xlu0 %524
    %v526 = vsel %vm507, %v501, 0.0
    %527 = vadd.xlane.f32.xlu0 %v526
    %v528 = vpop.xlane.xlu0 %527
    %v529 = vsel %vm507, %v504, 0.0
    %530 = vadd.xlane.f32.xlu0 %v529
    %v531 = vpop.xlane.xlu0 %530
    %v532 = vrcp.pop 32.0
    %v533 = vmul.f32 %v510, %v532
    %v534 = vmul.f32 %v513, %v532
    %v535 = vmul.f32 %v516, %v532
    %v536 = vmul.f32 %v519, %v532
    %v537 = vmul.f32 %v522, %v532
    %v538 = vmul.f32 %v525, %v532
    %v539 = vmul.f32 %v528, %v532
    %v540 = vmul.f32 %v531, %v532
    %v541 = vsub.f32 %v477, %v533
    %v542 = vsub.f32 %v480, %v534
    %v543 = vsub.f32 %v485, %v535
    %v544 = vsub.f32 %v488, %v536
    %v545 = vsub.f32 %v493, %v537
    %v546 = vsub.f32 %v496, %v538
    %v547 = vsub.f32 %v501, %v539
    %v548 = vsub.f32 %v504, %v540
    %v549 = vmul.f32 %v541, %v541
    %v550 = vmul.f32 %v542, %v542
    %v551 = vmul.f32 %v543, %v543
    %v552 = vmul.f32 %v544, %v544
    %v553 = vmul.f32 %v545, %v545
    %v554 = vmul.f32 %v546, %v546
    %v555 = vmul.f32 %v547, %v547
    %v556 = vmul.f32 %v548, %v548
    %v557 = vsel %vm507, %v549, 0.0
    %558 = vadd.xlane.f32.xlu0 %v557
    %v559 = vpop.xlane.xlu0 %558
    %v560 = vsel %vm507, %v550, 0.0
    %561 = vadd.xlane.f32.xlu0 %v560
    %v562 = vpop.xlane.xlu0 %561
    %v563 = vsel %vm507, %v551, 0.0
    %564 = vadd.xlane.f32.xlu0 %v563
    %v565 = vpop.xlane.xlu0 %564
    %v566 = vsel %vm507, %v552, 0.0
    %567 = vadd.xlane.f32.xlu0 %v566
    %v568 = vpop.xlane.xlu0 %567
    %v569 = vsel %vm507, %v553, 0.0
    %570 = vadd.xlane.f32.xlu0 %v569
    %v571 = vpop.xlane.xlu0 %570
    %v572 = vsel %vm507, %v554, 0.0
    %573 = vadd.xlane.f32.xlu0 %v572
    %v574 = vpop.xlane.xlu0 %573
    %v575 = vsel %vm507, %v555, 0.0
    %576 = vadd.xlane.f32.xlu0 %v575
    %v577 = vpop.xlane.xlu0 %576
    %v578 = vsel %vm507, %v556, 0.0
    %579 = vadd.xlane.f32.xlu0 %v578
    %v580 = vpop.xlane.xlu0 %579
    %v581 = vmul.f32 %v559, %v532
    %v582 = vmul.f32 %v562, %v532
    %v583 = vmul.f32 %v565, %v532
    %v584 = vmul.f32 %v568, %v532
    %v585 = vmul.f32 %v571, %v532
    %v586 = vmul.f32 %v574, %v532
    %v587 = vmul.f32 %v577, %v532
    %v588 = vmul.f32 %v580, %v532
    %v589 = vadd.f32 %v581, 1e-05
    %v590 = vadd.f32 %v582, 1e-05
    %v591 = vadd.f32 %v583, 1e-05
    %v592 = vadd.f32 %v584, 1e-05
    %v593 = vadd.f32 %v585, 1e-05
    %v594 = vadd.f32 %v586, 1e-05
    %v595 = vadd.f32 %v587, 1e-05
    %v596 = vadd.f32 %v588, 1e-05
    %v597 = vrsqrt.pop %v589
    %v598 = vrsqrt.pop %v590
    %v599 = vrsqrt.pop %v591
    %v600 = vrsqrt.pop %v592
    %v601 = vrsqrt.pop %v593
    %v602 = vrsqrt.pop %v594
    %v603 = vrsqrt.pop %v595
    %v604 = vrsqrt.pop %v596
    %v605 = vmul.f32 %v541, %v597
    %v606 = vmul.f32 %v542, %v598
    %v607 = vmul.f32 %v543, %v599
    %v608 = vmul.f32 %v544, %v600
    %v609 = vmul.f32 %v545, %v601
    %v610 = vmul.f32 %v546, %v602
    %v611 = vmul.f32 %v547, %v603
    %v612 = vmul.f32 %v548, %v604
    %v613 = vld [vmem:[%s2] sm:$0xff]
    %v614 = vld [vmem:[%s2 + $0x8] sm:$0xff]
    %v615 = vld [vmem:[%s2 + $0x10] sm:$0xff]
    %v616 = vld [vmem:[%s2 + $0x18] sm:$0xff]
    %v617 = vld [vmem:[%s2 + $0x20] sm:$0xff]
    %v618 = vld [vmem:[%s2 + $0x28] sm:$0xff]
    %v619 = vld [vmem:[%s2 + $0x30] sm:$0xff]
    %v620 = vld [vmem:[%s2 + $0x38] sm:$0xff]
    %622 = vset.pattern.permute.xlu0 0
    %623 = vperm.xlu0 %622, %v613
    %v624 = vpop.permute.xlu0 %623
    %627 = vset.pattern.permute.xlu0 0
    %628 = vperm.xlu0 %627, %v614
    %v629 = vpop.permute.xlu0 %628
    %632 = vset.pattern.permute.xlu0 0
    %633 = vperm.xlu0 %632, %v615
    %v634 = vpop.permute.xlu0 %633
    %637 = vset.pattern.permute.xlu0 0
    %638 = vperm.xlu0 %637, %v616
    %v639 = vpop.permute.xlu0 %638
    %642 = vset.pattern.permute.xlu0 0
    %643 = vperm.xlu0 %642, %v617
    %v644 = vpop.permute.xlu0 %643
    %647 = vset.pattern.permute.xlu0 0
    %648 = vperm.xlu0 %647, %v618
    %v649 = vpop.permute.xlu0 %648
    %652 = vset.pattern.permute.xlu0 0
    %653 = vperm.xlu0 %652, %v619
    %v654 = vpop.permute.xlu0 %653
    %657 = vset.pattern.permute.xlu0 0
    %658 = vperm.xlu0 %657, %v620
    %v659 = vpop.permute.xlu0 %658
    %v661 = vmul.f32 %v605, %v624
    %v662 = vmul.f32 %v606, %v629
    %v663 = vmul.f32 %v607, %v634
    %v664 = vmul.f32 %v608, %v639
    %v665 = vmul.f32 %v609, %v644
    %v666 = vmul.f32 %v610, %v649
    %v667 = vmul.f32 %v611, %v654
    %v668 = vmul.f32 %v612, %v659
    %v669 = vld [vmem:[%s3] sm:$0xff]
    %v670 = vld [vmem:[%s3 + $0x8] sm:$0xff]
    %v671 = vld [vmem:[%s3 + $0x10] sm:$0xff]
    %v672 = vld [vmem:[%s3 + $0x18] sm:$0xff]
    %v673 = vld [vmem:[%s3 + $0x20] sm:$0xff]
    %v674 = vld [vmem:[%s3 + $0x28] sm:$0xff]
    %v675 = vld [vmem:[%s3 + $0x30] sm:$0xff]
    %v676 = vld [vmem:[%s3 + $0x38] sm:$0xff]
    %678 = vset.pattern.permute.xlu0 0
    %679 = vperm.xlu0 %678, %v669
    %v680 = vpop.permute.xlu0 %679
    %683 = vset.pattern.permute.xlu0 0
    %684 = vperm.xlu0 %683, %v670
    %v685 = vpop.permute.xlu0 %684
    %688 = vset.pattern.permute.xlu0 0
    %689 = vperm.xlu0 %688, %v671
    %v690 = vpop.permute.xlu0 %689
    %693 = vset.pattern.permute.xlu0 0
    %694 = vperm.xlu0 %693, %v672
    %v695 = vpop.permute.xlu0 %694
    %698 = vset.pattern.permute.xlu0 0
    %699 = vperm.xlu0 %698, %v673
    %v700 = vpop.permute.xlu0 %699
    %703 = vset.pattern.permute.xlu0 0
    %704 = vperm.xlu0 %703, %v674
    %v705 = vpop.permute.xlu0 %704
    %708 = vset.pattern.permute.xlu0 0
    %709 = vperm.xlu0 %708, %v675
    %v710 = vpop.permute.xlu0 %709
    %713 = vset.pattern.permute.xlu0 0
    %714 = vperm.xlu0 %713, %v676
    %v715 = vpop.permute.xlu0 %714
    %v717 = vadd.f32 %v661, %v680
    %v718 = vadd.f32 %v662, %v685
    %v719 = vadd.f32 %v663, %v690
    %v720 = vadd.f32 %v664, %v695
    %v721 = vadd.f32 %v665, %v700
    %v722 = vadd.f32 %v666, %v705
    %v723 = vadd.f32 %v667, %v710
    %v724 = vadd.f32 %v668, %v715
    %vm725 = vcmp.ge.f32.partialorder %v717, 0.0
    %vm726 = vcmp.ge.f32.partialorder %v718, 0.0
    %vm727 = vcmp.ge.f32.partialorder %v719, 0.0
    %vm728 = vcmp.ge.f32.partialorder %v720, 0.0
    %vm729 = vcmp.ge.f32.partialorder %v721, 0.0
    %vm730 = vcmp.ge.f32.partialorder %v722, 0.0
    %vm731 = vcmp.ge.f32.partialorder %v723, 0.0
    %vm732 = vcmp.ge.f32.partialorder %v724, 0.0
    %v733 = vmul.f32 %v717, 0.01
    %v734 = vmul.f32 %v718, 0.01
    %v735 = vmul.f32 %v719, 0.01
    %v736 = vmul.f32 %v720, 0.01
    %v737 = vmul.f32 %v721, 0.01
    %v738 = vmul.f32 %v722, 0.01
    %v739 = vmul.f32 %v723, 0.01
    %v740 = vmul.f32 %v724, 0.01
    %v741 = vsel %vm725, %v717, %v733
    %v742 = vsel %vm726, %v718, %v734
    %v743 = vsel %vm727, %v719, %v735
    %v744 = vsel %vm728, %v720, %v736
    %v745 = vsel %vm729, %v721, %v737
    %v746 = vsel %vm730, %v722, %v738
    %v747 = vsel %vm731, %v723, %v739
    %v748 = vsel %vm732, %v724, %v740
    %v749 = vld [vmem:[%s4] sm:$0xff]
    %v750 = vld [vmem:[%s4 + $0x8] sm:$0xff]
    %v751 = vld [vmem:[%s4 + $0x10] sm:$0xff]
    %v752 = vld [vmem:[%s4 + $0x18] sm:$0xff]
    %v753 = vld [vmem:[%s4 + $0x20] sm:$0xff]
    %v754 = vld [vmem:[%s4 + $0x28] sm:$0xff]
    %v755 = vld [vmem:[%s4 + $0x30] sm:$0xff]
    %v756 = vld [vmem:[%s4 + $0x38] sm:$0xff]
    %v757 = vmul.f32 %v741, %v749
    %v758 = vmul.f32 %v742, %v750
    %v759 = vmul.f32 %v743, %v751
    %v760 = vmul.f32 %v744, %v752
    %v761 = vmul.f32 %v745, %v753
    %v762 = vmul.f32 %v746, %v754
    %v763 = vmul.f32 %v747, %v755
    %v764 = vmul.f32 %v748, %v756
    %v765 = vsel %vm507, %v757, 0.0
    %v766 = vsel %vm507, %v758, 0.0
    %v767 = vadd.f32 %v765, %v766
    %v768 = vsel %vm507, %v759, 0.0
    %v769 = vadd.f32 %v767, %v768
    %v770 = vsel %vm507, %v760, 0.0
    %v771 = vadd.f32 %v769, %v770
    %v772 = vsel %vm507, %v761, 0.0
    %v773 = vadd.f32 %v771, %v772
    %v774 = vsel %vm507, %v762, 0.0
    %v775 = vadd.f32 %v773, %v774
    %v776 = vsel %vm507, %v763, 0.0
    %v777 = vadd.f32 %v775, %v776
    %v778 = vsel %vm507, %v764, 0.0
    %v779 = vadd.f32 %v777, %v778
    %v780 = vrot.slane %v779, 4
    %v781 = vadd.f32 %v779, %v780
    %v782 = vrot.slane %v781, 2
    %v783 = vadd.f32 %v781, %v782
    %v784 = vrot.slane %v783, 1
    %v785 = vadd.f32 %v783, %v784
    %v786 = vld [vmem:[%s5] sm:$0xff]
    %v787 = vld [vmem:[%s5 + $0x8] sm:$0xff]
    %v788 = vld [vmem:[%s5 + $0x10] sm:$0xff]
    %v789 = vld [vmem:[%s5 + $0x18] sm:$0xff]
    %v791 = vsel %vm507, %v785, 0
    %793 = vmatprep.subr.mxu0 0.0
    %794 = vmatpush1.msra.mxu0 %v786
    %795 = vmatprep.subr.mxu0 0.0
    %796 = vmatpush1.msra.mxu0 %v787
    %797 = vmatprep.subr.mxu0 0.0
    %798 = vmatpush1.msra.mxu0 %v788
    %799 = vmatprep.subr.mxu0 0.0
    %800 = vmatpush1.msra.mxu0 %v789
    %801 = vmatprep.subr.mxu0 0.0
    %802 = vmatpush1.msra.mxu0 0.0
    %803 = vmatprep.subr.mxu0 0.0
    %804 = vmatpush1.msra.mxu0 0.0
    %805 = vmatprep.subr.mxu0 0.0
    %806 = vmatpush1.msra.mxu0 0.0
    %807 = vmatprep.subr.mxu0 0.0
    %808 = vmatpush1.msra.mxu0 0.0
    %809 = vmatprep.subr.mxu0 0.0
    %810 = vmatpush1.msra.mxu0 0.0
    %811 = vmatprep.subr.mxu0 0.0
    %812 = vmatpush1.msra.mxu0 0.0
    %813 = vmatprep.subr.mxu0 0.0
    %814 = vmatpush1.msra.mxu0 0.0
    %815 = vmatprep.subr.mxu0 0.0
    %816 = vmatpush1.msra.mxu0 0.0
    %817 = vmatprep.subr.mxu0 0.0
    %818 = vmatpush1.msra.mxu0 0.0
    %819 = vmatprep.subr.mxu0 0.0
    %820 = vmatpush1.msra.mxu0 0.0
    %821 = vmatprep.subr.mxu0 0.0
    %822 = vmatpush1.msra.mxu0 0.0
    %823 = vmatprep.subr.mxu0 0.0
    %824 = vmatpush1.msra.mxu0 0.0
    %825 = vmatprep.subr.mxu0 0.0
    %826 = vmatpush1.msra.mxu0 0.0
    %827 = vmatprep.subr.mxu0 0.0
    %828 = vmatpush1.msra.mxu0 0.0
    %829 = vmatprep.subr.mxu0 0.0
    %830 = vmatpush1.msra.mxu0 0.0
    %831 = vmatprep.subr.mxu0 0.0
    %832 = vmatpush1.msra.mxu0 0.0
    %833 = vmatprep.subr.mxu0 0.0
    %834 = vmatpush1.msra.mxu0 0.0
    %835 = vmatprep.subr.mxu0 0.0
    %836 = vmatpush1.msra.mxu0 0.0
    %837 = vmatprep.subr.mxu0 0.0
    %838 = vmatpush1.msra.mxu0 0.0
    %839 = vmatprep.subr.mxu0 0.0
    %840 = vmatpush1.msra.mxu0 0.0
    %841 = vmatprep.subr.mxu0 0.0
    %842 = vmatpush1.msra.mxu0 0.0
    %843 = vmatprep.subr.mxu0 0.0
    %844 = vmatpush1.msra.mxu0 0.0
    %845 = vmatprep.subr.mxu0 0.0
    %846 = vmatpush1.msra.mxu0 0.0
    %847 = vmatprep.subr.mxu0 0.0
    %848 = vmatpush1.msra.mxu0 0.0
    %849 = vmatprep.subr.mxu0 0.0
    %850 = vmatpush1.msra.mxu0 0.0
    %851 = vmatprep.subr.mxu0 0.0
    %852 = vmatpush1.msra.mxu0 0.0
    %853 = vmatprep.subr.mxu0 0.0
    %854 = vmatpush1.msra.mxu0 0.0
    %855 = vmatprep.subr.mxu0 0.0
    %856 = vmatpush1.msra.mxu0 0.0
    %857 = vmatprep.mubr.f32.mxu0 0.0
    %858 = vmatmul.mubr.f32.gmra.mrb[0].mxu0 %v791
    %v859 = vpop.f32.mrb[0].mxu0
    %v860 = vadd.f32 0.0, %v859
    %v861 = vpop.f32.mrb[0].mxu0
    %862 = vdwg.mxu0
    %vm863 = vcmask 8192
    %864 = vst.msk [vmem:[#allocation2] sm:$0x1] %vm863, %v860
    // Predicated region
    $region26: #{discriminator_forward.7} parent=1 // pred_check
      _
    $region27: #{discriminator_forward.7} parent=1 // pred_check_branch
      %866 = sbr.rel (0) target = $region29
    $region28: #{discriminator_forward.7} parent=1 // pred_region
      %s868 = ssub.s32 16, 16
      %869 = vsyncadd [#allocation3], %s868
      %s871 = sshll.u32 [#allocation2], 4
      %s872 = int_to_ptr.vmem [resolvable:$true] %s871
      %874 = dma.vmem_to_hbm [thread:$0]  %s872, 16, %s6, [#allocation3]
    $region29: #{discriminator_forward.7} parent=1 // pred_fallthru
      _
    // Predicated region
    $region30: #{discriminator_forward.7} parent=1 // pred_check
      _
    $region31: #{discriminator_forward.7} parent=1 // pred_check_branch
      %876 = sbr.rel (0) target = $region33
    $region32: #{discriminator_forward.7} parent=1 // pred_region
      %877 = dma.done [#allocation3], 16
    $region33: #{discriminator_forward.7} parent=1 // pred_fallthru
      _
    %878 = vsyncpa [#allocation3], 1

</llo_original>
